<compile_context>
chip_gen: v7x
topology: tpu7x:2x2x1
jax: 0.10.0
libtpu: 0.0.40
codegen_flags: <defaults>
</compile_context>

<pallas_src>
import functools

import jax
import jax.numpy as jnp
from jax import lax
from jax.experimental import pallas as pl
from jax.experimental.pallas import tpu as pltpu


# ----------------------------------------------------------------------------
# Helpers
# ----------------------------------------------------------------------------
def _round_up(n, m):
    return ((n + m - 1) // m) * m


def _leaky_relu(x, negative_slope=0.01):
    # nn.LeakyReLU default negative_slope = 0.01
    return jnp.where(x > 0, x, negative_slope * x)


# ----------------------------------------------------------------------------
# Parameter construction (deterministic, synthetic — mirrors GeoNet.__init__)
# ----------------------------------------------------------------------------
def init_geonet_params(key, feature_vector_size, d_in, d_out, dims, skip_in):
    """Returns a flat list of (W, b) with W:(in,out), b:(1,out), in the order
    [lin_0 ... lin_{L-1}, den_layer, feat_layer]."""
    dims = [d_in] + list(dims)
    num_layers = len(dims) - 2  # number of hidden Linear layers (self.lins)
    params = []

    def _make_linear(key, in_dim, out_dim):
        k1, k2 = jax.random.split(key)
        w = jax.random.normal(k1, (in_dim, out_dim), jnp.float32) * (1.0 / jnp.sqrt(in_dim))
        b = jax.random.normal(k2, (1, out_dim), jnp.float32) * 0.01
        return w, b

    for l in range(num_layers):
        if (l + 1) in skip_in:
            out_dim = dims[l + 1] - dims[0]
        else:
            out_dim = dims[l + 1]
        key, sub = jax.random.split(key)
        params.append(_make_linear(sub, dims[l], out_dim))

    for out_dim in (d_out, feature_vector_size):
        key, sub = jax.random.split(key)
        params.append(_make_linear(sub, dims[-1], out_dim))
    return params, num_layers


# ----------------------------------------------------------------------------
# Host-side packing: ONE transposed, zero-padded weight slab (bias fused as
# an extra trailing column).  Skip layers are packed as a single fused block
# that contracts concat([act, input]).  The den/feat heads are fused as
# [feat | den].  All row counts padded to multiples of 8; the zero padding is
# inert because padded activation rows are always exactly zero.
# ----------------------------------------------------------------------------
def pack_geonet_params(params, num_hidden, skip_in, d_in, d_out, feature_vector_size):
    """Returns (w_slab, layer_meta, head_meta, d_in_pad, bias_col, head_out_pad).

    layer_meta[i] = (row, out_pad, in_cols, is_skip)
    head_meta     = (row, out_pad, in_cols)
    w_slab[:, bias_col] holds the biases (f32); weight columns live in [0, bias_col).
    """
    skip_in = set(skip_in)
    d_in_pad = _round_up(d_in, 8)

    # --- pass 1: row / column layout ---
    layer_meta = []
    row = 0
    prev_pad = d_in_pad
    max_cols = d_in_pad
    for i in range(num_hidden):
        w, _ = params[i]
        out_i = w.shape[1]
        out_pad = _round_up(out_i, 8)
        is_skip = i in skip_in
        in_cols = prev_pad + (d_in_pad if is_skip else 0)
        layer_meta.append((row, out_pad, in_cols, is_skip))
        row += out_pad
        max_cols = max(max_cols, in_cols)
        prev_pad = out_pad

    head_out = feature_vector_size + d_out
    head_out_pad = _round_up(head_out, 8)
    head_meta = (row, head_out_pad, prev_pad)
    max_cols = max(max_cols, prev_pad)
    total_rows = row + head_out_pad

    bias_col = max_cols
    w_slab = jnp.zeros((total_rows, max_cols + 1), jnp.float32)

    # --- pass 2: fill ---
    prev_pad = d_in_pad
    for i in range(num_hidden):
        w, b = params[i]                       # w:(in,out), b:(1,out)
        out_i = w.shape[1]
        r, out_pad, in_cols, is_skip = layer_meta[i]
        if is_skip:
            # forward does cat([act, input]) @ W; split W into the part that
            # contracts the running activation (first p rows) and the part
            # that contracts the original input (last d_in rows).
            p = w.shape[0] - d_in
            w_slab = w_slab.at[r:r + out_i, 0:p].set(w[:p, :].T)
            w_slab = w_slab.at[r:r + out_i, prev_pad:prev_pad + d_in].set(w[p:, :].T)
        else:
            w_slab = w_slab.at[r:r + out_i, 0:w.shape[0]].set(w.T)
        w_slab = w_slab.at[r:r + out_i, bias_col].set(b[0, :])
        prev_pad = out_pad

    # fused head: [feat | den]
    w_den, b_den = params[num_hidden]
    w_feat, b_feat = params[num_hidden + 1]
    w_head = jnp.concatenate([w_feat, w_den], axis=1)     # (in, fvs + d_out)
    b_head = jnp.concatenate([b_feat, b_den], axis=1)     # (1,  fvs + d_out)
    r = head_meta[0]
    w_slab = w_slab.at[r:r + head_out, 0:w_head.shape[0]].set(w_head.T)
    w_slab = w_slab.at[r:r + head_out, bias_col].set(b_head[0, :])

    return w_slab, tuple(layer_meta), head_meta, d_in_pad, bias_col, head_out_pad


# ----------------------------------------------------------------------------
# Pallas kernel: full MLP on one lane-dense tile of points, processed in
# 128/256-lane sub-chunks so vreg pressure stays bounded at large block_n.
# ----------------------------------------------------------------------------
def _geonet_kernel(x_ref, w_ref, out_ref, *, layer_meta, head_meta, bias_col,
                   chunk, negative_slope):
    # Hoist weight loads + bf16 casts out of the chunk loop (tiny, per-step).
    w_blocks = []
    for (r, out_pad, in_cols, is_skip) in layer_meta:
        w = w_ref[r:r + out_pad, 0:in_cols].astype(jnp.bfloat16)
        b = w_ref[r:r + out_pad, bias_col:bias_col + 1]        # f32 bias
        w_blocks.append((w, b, is_skip))
    hr, h_out, h_in = head_meta
    wh = w_ref[hr:hr + h_out, 0:h_in].astype(jnp.bfloat16)
    bh = w_ref[hr:hr + h_out, bias_col:bias_col + 1]

    block_n = out_ref.shape[1]
    n_chunks = block_n // chunk

    def chunk_body(c, carry):
        off = pl.multiple_of(c * chunk, chunk)
        # bf16 MXU operands; f32 accumulation / elementwise math.
        x_in = x_ref[:, pl.ds(off, chunk)].astype(jnp.bfloat16)   # (d_in_pad, ck)
        act = x_in
        for (w, b, is_skip) in w_blocks:
            if is_skip:
                # fused skip: single dot contracts concat([act, input]).
                act = jnp.concatenate([act, x_in], axis=0)
            y = jnp.dot(w, act, preferred_element_type=jnp.float32) + b
            act = jnp.where(y > 0, y, negative_slope * y).astype(jnp.bfloat16)
        yh = jnp.dot(wh, act, preferred_element_type=jnp.float32) + bh
        # Full (head_out_pad, chunk) store: lane-aligned, unmasked vst.
        out_ref[:, pl.ds(off, chunk)] = yh.astype(out_ref.dtype)
        return carry

    lax.fori_loop(0, n_chunks, chunk_body, 0, unroll=True)


# ----------------------------------------------------------------------------
# Builder: packs parameters ONCE, returns a jitted forward(x) -> (den, feat).
# ----------------------------------------------------------------------------
def make_geonet_forward(params, num_hidden, *, skip_in, d_in, d_out,
                        feature_vector_size, block_n=1024, chunk=256):
    assert block_n % chunk == 0 and chunk % 128 == 0
    (w_slab, layer_meta, head_meta, d_in_pad, bias_col,
     head_out_pad) = pack_geonet_params(params, num_hidden, skip_in, d_in,
                                        d_out, feature_vector_size)
    head_out = feature_vector_size + d_out

    kernel = functools.partial(
        _geonet_kernel, layer_meta=layer_meta, head_meta=head_meta,
        bias_col=bias_col, chunk=chunk, negative_slope=0.01)

    # MXU flops per (padded) point; no transcendentals in the kernel.
    flops_per_pt = 2 * (sum(o * c for (_, o, c, _) in layer_meta)
                        + head_meta[1] * head_meta[2])

    @jax.jit
    def forward(x):
        assert x.shape[1] == d_in
        N = x.shape[0]
        N_pad = _round_up(N, block_n)
        # Lane-dense transposed input, zero-padded to (d_in_pad, N_pad).
        xt = jnp.pad(x.T.astype(jnp.float32),
                     ((0, d_in_pad - d_in), (0, N_pad - N)))

        cost = pl.CostEstimate(
            flops=flops_per_pt * N_pad,
            transcendentals=0,
            bytes_accessed=4 * (d_in_pad * N_pad + head_out_pad * N_pad
                                + int(w_slab.size)))

        out_t = pl.pallas_call(
            kernel,
            grid=(N_pad // block_n,),
            in_specs=[
                pl.BlockSpec((d_in_pad, block_n), lambda i: (0, i)),  # points
                pl.BlockSpec(w_slab.shape, lambda i: (0, 0)),         # weights+bias
            ],
            out_specs=pl.BlockSpec((head_out_pad, block_n), lambda i: (0, i)),
            out_shape=jax.ShapeDtypeStruct((head_out_pad, N_pad), jnp.float32),
            compiler_params=pltpu.CompilerParams(
                dimension_semantics=("parallel",)),
            cost_estimate=cost,
        )(xt, w_slab)

        feat = out_t[:feature_vector_size, :N].T
        den = out_t[feature_vector_size:head_out, :N].T
        return den, feat

    return forward


# ----------------------------------------------------------------------------
# Pure-JAX reference (matches PyTorch forward semantics exactly, f32)
# ----------------------------------------------------------------------------
def geonet_reference(x, params, num_hidden, skip_in):
    inp = x
    h = x
    for i in range(num_hidden):
        w, b = params[i]
        if i in skip_in:
            h = jnp.concatenate([h, inp], axis=-1)
        h = _leaky_relu(h @ w + b)
    w_den, b_den = params[num_hidden]
    w_feat, b_feat = params[num_hidden + 1]
    return h @ w_den + b_den, h @ w_feat + b_feat


if __name__ == "__main__":
    # Config consistent with the module: GeoNet(feature_vector_size=16, d_in=4,
    # d_out=1, dims=[32, 32, 32, 32], skip_in=(2,))
    feature_vector_size = 16
    d_in = 4
    d_out = 1
    dims = [32, 32, 32, 32]
    skip_in = (2,)

    key = jax.random.PRNGKey(0)
    pkey, xkey, xkey2 = jax.random.split(key, 3)
    params, num_hidden = init_geonet_params(
        pkey, feature_vector_size, d_in, d_out, dims, skip_in)

    # Main check: N=2048 points -> 2 even parallel grid steps at block_n=1024
    # (splits cleanly across v7x's 2 TensorCores), 4 inner 256-lane chunks each.
    fwd = make_geonet_forward(
        params, num_hidden, skip_in=skip_in, d_in=d_in, d_out=d_out,
        feature_vector_size=feature_vector_size, block_n=1024, chunk=256)

    N = 2048
    x = jax.random.normal(xkey, (N, d_in), jnp.float32)
    den, feat = fwd(x)
    jax.block_until_ready((den, feat))

    den_ref, feat_ref = geonet_reference(x, params, num_hidden, skip_in)
    assert den.shape == (N, d_out) and feat.shape == (N, feature_vector_size)
    # bf16 MXU operands (f32 accumulation) -> relaxed tolerance vs f32 reference.
    assert jnp.allclose(den, den_ref, atol=5e-2, rtol=5e-2)
    assert jnp.allclose(feat, feat_ref, atol=5e-2, rtol=5e-2)

    # Ragged-N check: exercises the pad-to-block path (no divisibility assert).
    fwd_small = make_geonet_forward(
        params, num_hidden, skip_in=skip_in, d_in=d_in, d_out=d_out,
        feature_vector_size=feature_vector_size, block_n=512, chunk=128)
    N2 = 300
    x2 = jax.random.normal(xkey2, (N2, d_in), jnp.float32)
    den2, feat2 = fwd_small(x2)
    jax.block_until_ready((den2, feat2))
    den2_ref, feat2_ref = geonet_reference(x2, params, num_hidden, skip_in)
    assert jnp.allclose(den2, den2_ref, atol=5e-2, rtol=5e-2)
    assert jnp.allclose(feat2, feat2_ref, atol=5e-2, rtol=5e-2)

    print("KERNEL_OK")
</pallas_src>

<mosaic_0001>
module attributes {stable_mosaic.version = 11 : i64} {
  func.func @_geonet_kernel(%arg0: i32, %arg1: memref<8x1024xf32, #tpu.memory_space<vmem>>, %arg2: memref<120x41xf32, #tpu.memory_space<vmem>>, %arg3: memref<24x1024xf32, #tpu.memory_space<vmem>>) attributes {dimension_semantics = [#tpu.dimension_semantics<parallel>], iteration_bounds = array<i64: 2>, scalar_prefetch = 0 : i64, scratch_operands = 0 : i64, tpu.core_type = #tpu.core_type<tc>, window_params = [{transform_indices = @transform_0, window_bounds = array<i64: 8, 1024>}, {pipeline_mode = #tpu.pipeline_mode<synchronous>, transform_indices = @transform_1, window_bounds = array<i64: 120, 41>}, {transform_indices = @transform_2, window_bounds = array<i64: 24, 1024>}]} {
    %c0 = arith.constant 0 : index
    %c0_0 = arith.constant 0 : index
    %0 = vector.load %arg2[%c0, %c0_0] : memref<120x41xf32, #tpu.memory_space<vmem>>, vector<32x8xf32>
    %1 = arith.truncf %0 : vector<32x8xf32> to vector<32x8xbf16>
    %c0_1 = arith.constant 0 : index
    %c40 = arith.constant 40 : index
    %2 = vector.load %arg2[%c0_1, %c40] : memref<120x41xf32, #tpu.memory_space<vmem>>, vector<32x1xf32>
    %c32 = arith.constant 32 : index
    %c0_2 = arith.constant 0 : index
    %3 = vector.load %arg2[%c32, %c0_2] : memref<120x41xf32, #tpu.memory_space<vmem>>, vector<32x32xf32>
    %4 = arith.truncf %3 : vector<32x32xf32> to vector<32x32xbf16>
    %c32_3 = arith.constant 32 : index
    %c40_4 = arith.constant 40 : index
    %5 = vector.load %arg2[%c32_3, %c40_4] : memref<120x41xf32, #tpu.memory_space<vmem>>, vector<32x1xf32>
    %c64 = arith.constant 64 : index
    %c0_5 = arith.constant 0 : index
    %6 = vector.load %arg2[%c64, %c0_5] : memref<120x41xf32, #tpu.memory_space<vmem>>, vector<32x40xf32>
    %7 = arith.truncf %6 : vector<32x40xf32> to vector<32x40xbf16>
    %c64_6 = arith.constant 64 : index
    %c40_7 = arith.constant 40 : index
    %8 = vector.load %arg2[%c64_6, %c40_7] : memref<120x41xf32, #tpu.memory_space<vmem>>, vector<32x1xf32>
    %c96 = arith.constant 96 : index
    %c0_8 = arith.constant 0 : index
    %9 = vector.load %arg2[%c96, %c0_8] : memref<120x41xf32, #tpu.memory_space<vmem>>, vector<24x32xf32>
    %10 = arith.truncf %9 : vector<24x32xf32> to vector<24x32xbf16>
    %c96_9 = arith.constant 96 : index
    %c40_10 = arith.constant 40 : index
    %11 = vector.load %arg2[%c96_9, %c40_10] : memref<120x41xf32, #tpu.memory_space<vmem>>, vector<24x1xf32>
    %c0_i32 = arith.constant 0 : i32
    %c256_i32 = arith.constant 256 : i32
    %12 = arith.muli %c0_i32, %c256_i32 : i32
    %13 = tpu.assume_multiple %12, 256 : i32
    %c0_11 = arith.constant 0 : index
    %14 = arith.index_cast %13 : i32 to index
    %15 = vector.load %arg1[%c0_11, %14] : memref<8x1024xf32, #tpu.memory_space<vmem>>, vector<8x256xf32>
    %16 = arith.truncf %15 : vector<8x256xf32> to vector<8x256xbf16>
    %cst = arith.constant dense<0.000000e+00> : vector<32x256xf32>
    %17 = tpu.matmul %1, %16, %cst {dimension_numbers = #tpu.dot_dimension_numbers<[1], [0], [0], [1], [0, 0, 1, 1], [], []>} : vector<32x8xbf16>, vector<8x256xbf16>, vector<32x256xf32> -> vector<32x256xf32>
    %18 = vector.broadcast %2 : vector<32x1xf32> to vector<32x256xf32>
    %19 = arith.addf %17, %18 : vector<32x256xf32>
    %cst_12 = arith.constant 0.000000e+00 : f32
    %20 = vector.broadcast %cst_12 : f32 to vector<32x256xf32>
    %21 = arith.cmpf ogt, %19, %20 : vector<32x256xf32>
    %cst_13 = arith.constant 0.00999999977 : f32
    %22 = vector.broadcast %cst_13 : f32 to vector<32x256xf32>
    %23 = arith.mulf %22, %19 : vector<32x256xf32>
    %24 = arith.select %21, %19, %23 : vector<32x256xi1>, vector<32x256xf32>
    %25 = arith.truncf %24 : vector<32x256xf32> to vector<32x256xbf16>
    %cst_14 = arith.constant dense<0.000000e+00> : vector<32x256xf32>
    %26 = tpu.matmul %4, %25, %cst_14 {dimension_numbers = #tpu.dot_dimension_numbers<[1], [0], [0], [1], [0, 0, 1, 1], [], []>} : vector<32x32xbf16>, vector<32x256xbf16>, vector<32x256xf32> -> vector<32x256xf32>
    %27 = vector.broadcast %5 : vector<32x1xf32> to vector<32x256xf32>
    %28 = arith.addf %26, %27 : vector<32x256xf32>
    %cst_15 = arith.constant 0.000000e+00 : f32
    %29 = vector.broadcast %cst_15 : f32 to vector<32x256xf32>
    %30 = arith.cmpf ogt, %28, %29 : vector<32x256xf32>
    %cst_16 = arith.constant 0.00999999977 : f32
    %31 = vector.broadcast %cst_16 : f32 to vector<32x256xf32>
    %32 = arith.mulf %31, %28 : vector<32x256xf32>
    %33 = arith.select %30, %28, %32 : vector<32x256xi1>, vector<32x256xf32>
    %34 = arith.truncf %33 : vector<32x256xf32> to vector<32x256xbf16>
    %35 = tpu.concatenate %34, %16 in 0 : vector<32x256xbf16>, vector<8x256xbf16> -> vector<40x256xbf16>
    %cst_17 = arith.constant dense<0.000000e+00> : vector<32x256xf32>
    %36 = tpu.matmul %7, %35, %cst_17 {dimension_numbers = #tpu.dot_dimension_numbers<[1], [0], [0], [1], [0, 0, 1, 1], [], []>} : vector<32x40xbf16>, vector<40x256xbf16>, vector<32x256xf32> -> vector<32x256xf32>
    %37 = vector.broadcast %8 : vector<32x1xf32> to vector<32x256xf32>
    %38 = arith.addf %36, %37 : vector<32x256xf32>
    %cst_18 = arith.constant 0.000000e+00 : f32
    %39 = vector.broadcast %cst_18 : f32 to vector<32x256xf32>
    %40 = arith.cmpf ogt, %38, %39 : vector<32x256xf32>
    %cst_19 = arith.constant 0.00999999977 : f32
    %41 = vector.broadcast %cst_19 : f32 to vector<32x256xf32>
    %42 = arith.mulf %41, %38 : vector<32x256xf32>
    %43 = arith.select %40, %38, %42 : vector<32x256xi1>, vector<32x256xf32>
    %44 = arith.truncf %43 : vector<32x256xf32> to vector<32x256xbf16>
    %cst_20 = arith.constant dense<0.000000e+00> : vector<24x256xf32>
    %45 = tpu.matmul %10, %44, %cst_20 {dimension_numbers = #tpu.dot_dimension_numbers<[1], [0], [0], [1], [0, 0, 1, 1], [], []>} : vector<24x32xbf16>, vector<32x256xbf16>, vector<24x256xf32> -> vector<24x256xf32>
    %46 = vector.broadcast %11 : vector<24x1xf32> to vector<24x256xf32>
    %47 = arith.addf %45, %46 : vector<24x256xf32>
    %c0_21 = arith.constant 0 : index
    %48 = arith.index_cast %13 : i32 to index
    %49 = vector.load %arg3[%c0_21, %48] : memref<24x1024xf32, #tpu.memory_space<vmem>>, vector<24x256xf32>
    tpu.vector_store %arg3[%c0_21, %48], %47 {strides = array<i32>} : memref<24x1024xf32, #tpu.memory_space<vmem>>, vector<24x256xf32>,
    %c1_i32 = arith.constant 1 : i32
    %c256_i32_22 = arith.constant 256 : i32
    %50 = arith.muli %c1_i32, %c256_i32_22 : i32
    %51 = tpu.assume_multiple %50, 256 : i32
    %c0_23 = arith.constant 0 : index
    %52 = arith.index_cast %51 : i32 to index
    %53 = vector.load %arg1[%c0_23, %52] : memref<8x1024xf32, #tpu.memory_space<vmem>>, vector<8x256xf32>
    %54 = arith.truncf %53 : vector<8x256xf32> to vector<8x256xbf16>
    %cst_24 = arith.constant dense<0.000000e+00> : vector<32x256xf32>
    %55 = tpu.matmul %1, %54, %cst_24 {dimension_numbers = #tpu.dot_dimension_numbers<[1], [0], [0], [1], [0, 0, 1, 1], [], []>} : vector<32x8xbf16>, vector<8x256xbf16>, vector<32x256xf32> -> vector<32x256xf32>
    %56 = vector.broadcast %2 : vector<32x1xf32> to vector<32x256xf32>
    %57 = arith.addf %55, %56 : vector<32x256xf32>
    %cst_25 = arith.constant 0.000000e+00 : f32
    %58 = vector.broadcast %cst_25 : f32 to vector<32x256xf32>
    %59 = arith.cmpf ogt, %57, %58 : vector<32x256xf32>
    %cst_26 = arith.constant 0.00999999977 : f32
    %60 = vector.broadcast %cst_26 : f32 to vector<32x256xf32>
    %61 = arith.mulf %60, %57 : vector<32x256xf32>
    %62 = arith.select %59, %57, %61 : vector<32x256xi1>, vector<32x256xf32>
    %63 = arith.truncf %62 : vector<32x256xf32> to vector<32x256xbf16>
    %cst_27 = arith.constant dense<0.000000e+00> : vector<32x256xf32>
    %64 = tpu.matmul %4, %63, %cst_27 {dimension_numbers = #tpu.dot_dimension_numbers<[1], [0], [0], [1], [0, 0, 1, 1], [], []>} : vector<32x32xbf16>, vector<32x256xbf16>, vector<32x256xf32> -> vector<32x256xf32>
    %65 = vector.broadcast %5 : vector<32x1xf32> to vector<32x256xf32>
    %66 = arith.addf %64, %65 : vector<32x256xf32>
    %cst_28 = arith.constant 0.000000e+00 : f32
    %67 = vector.broadcast %cst_28 : f32 to vector<32x256xf32>
    %68 = arith.cmpf ogt, %66, %67 : vector<32x256xf32>
    %cst_29 = arith.constant 0.00999999977 : f32
    %69 = vector.broadcast %cst_29 : f32 to vector<32x256xf32>
    %70 = arith.mulf %69, %66 : vector<32x256xf32>
    %71 = arith.select %68, %66, %70 : vector<32x256xi1>, vector<32x256xf32>
    %72 = arith.truncf %71 : vector<32x256xf32> to vector<32x256xbf16>
    %73 = tpu.concatenate %72, %54 in 0 : vector<32x256xbf16>, vector<8x256xbf16> -> vector<40x256xbf16>
    %cst_30 = arith.constant dense<0.000000e+00> : vector<32x256xf32>
    %74 = tpu.matmul %7, %73, %cst_30 {dimension_numbers = #tpu.dot_dimension_numbers<[1], [0], [0], [1], [0, 0, 1, 1], [], []>} : vector<32x40xbf16>, vector<40x256xbf16>, vector<32x256xf32> -> vector<32x256xf32>
    %75 = vector.broadcast %8 : vector<32x1xf32> to vector<32x256xf32>
    %76 = arith.addf %74, %75 : vector<32x256xf32>
    %cst_31 = arith.constant 0.000000e+00 : f32
    %77 = vector.broadcast %cst_31 : f32 to vector<32x256xf32>
    %78 = arith.cmpf ogt, %76, %77 : vector<32x256xf32>
    %cst_32 = arith.constant 0.00999999977 : f32
    %79 = vector.broadcast %cst_32 : f32 to vector<32x256xf32>
    %80 = arith.mulf %79, %76 : vector<32x256xf32>
    %81 = arith.select %78, %76, %80 : vector<32x256xi1>, vector<32x256xf32>
    %82 = arith.truncf %81 : vector<32x256xf32> to vector<32x256xbf16>
    %cst_33 = arith.constant dense<0.000000e+00> : vector<24x256xf32>
    %83 = tpu.matmul %10, %82, %cst_33 {dimension_numbers = #tpu.dot_dimension_numbers<[1], [0], [0], [1], [0, 0, 1, 1], [], []>} : vector<24x32xbf16>, vector<32x256xbf16>, vector<24x256xf32> -> vector<24x256xf32>
    %84 = vector.broadcast %11 : vector<24x1xf32> to vector<24x256xf32>
    %85 = arith.addf %83, %84 : vector<24x256xf32>
    %c0_34 = arith.constant 0 : index
    %86 = arith.index_cast %51 : i32 to index
    %87 = vector.load %arg3[%c0_34, %86] : memref<24x1024xf32, #tpu.memory_space<vmem>>, vector<24x256xf32>
    tpu.vector_store %arg3[%c0_34, %86], %85 {strides = array<i32>} : memref<24x1024xf32, #tpu.memory_space<vmem>>, vector<24x256xf32>,
    %c2_i32 = arith.constant 2 : i32
    %c256_i32_35 = arith.constant 256 : i32
    %88 = arith.muli %c2_i32, %c256_i32_35 : i32
    %89 = tpu.assume_multiple %88, 256 : i32
    %c0_36 = arith.constant 0 : index
    %90 = arith.index_cast %89 : i32 to index
    %91 = vector.load %arg1[%c0_36, %90] : memref<8x1024xf32, #tpu.memory_space<vmem>>, vector<8x256xf32>
    %92 = arith.truncf %91 : vector<8x256xf32> to vector<8x256xbf16>
    %cst_37 = arith.constant dense<0.000000e+00> : vector<32x256xf32>
    %93 = tpu.matmul %1, %92, %cst_37 {dimension_numbers = #tpu.dot_dimension_numbers<[1], [0], [0], [1], [0, 0, 1, 1], [], []>} : vector<32x8xbf16>, vector<8x256xbf16>, vector<32x256xf32> -> vector<32x256xf32>
    %94 = vector.broadcast %2 : vector<32x1xf32> to vector<32x256xf32>
    %95 = arith.addf %93, %94 : vector<32x256xf32>
    %cst_38 = arith.constant 0.000000e+00 : f32
    %96 = vector.broadcast %cst_38 : f32 to vector<32x256xf32>
    %97 = arith.cmpf ogt, %95, %96 : vector<32x256xf32>
    %cst_39 = arith.constant 0.00999999977 : f32
    %98 = vector.broadcast %cst_39 : f32 to vector<32x256xf32>
    %99 = arith.mulf %98, %95 : vector<32x256xf32>
    %100 = arith.select %97, %95, %99 : vector<32x256xi1>, vector<32x256xf32>
    %101 = arith.truncf %100 : vector<32x256xf32> to vector<32x256xbf16>
    %cst_40 = arith.constant dense<0.000000e+00> : vector<32x256xf32>
    %102 = tpu.matmul %4, %101, %cst_40 {dimension_numbers = #tpu.dot_dimension_numbers<[1], [0], [0], [1], [0, 0, 1, 1], [], []>} : vector<32x32xbf16>, vector<32x256xbf16>, vector<32x256xf32> -> vector<32x256xf32>
    %103 = vector.broadcast %5 : vector<32x1xf32> to vector<32x256xf32>
    %104 = arith.addf %102, %103 : vector<32x256xf32>
    %cst_41 = arith.constant 0.000000e+00 : f32
    %105 = vector.broadcast %cst_41 : f32 to vector<32x256xf32>
    %106 = arith.cmpf ogt, %104, %105 : vector<32x256xf32>
    %cst_42 = arith.constant 0.00999999977 : f32
    %107 = vector.broadcast %cst_42 : f32 to vector<32x256xf32>
    %108 = arith.mulf %107, %104 : vector<32x256xf32>
    %109 = arith.select %106, %104, %108 : vector<32x256xi1>, vector<32x256xf32>
    %110 = arith.truncf %109 : vector<32x256xf32> to vector<32x256xbf16>
    %111 = tpu.concatenate %110, %92 in 0 : vector<32x256xbf16>, vector<8x256xbf16> -> vector<40x256xbf16>
    %cst_43 = arith.constant dense<0.000000e+00> : vector<32x256xf32>
    %112 = tpu.matmul %7, %111, %cst_43 {dimension_numbers = #tpu.dot_dimension_numbers<[1], [0], [0], [1], [0, 0, 1, 1], [], []>} : vector<32x40xbf16>, vector<40x256xbf16>, vector<32x256xf32> -> vector<32x256xf32>
    %113 = vector.broadcast %8 : vector<32x1xf32> to vector<32x256xf32>
    %114 = arith.addf %112, %113 : vector<32x256xf32>
    %cst_44 = arith.constant 0.000000e+00 : f32
    %115 = vector.broadcast %cst_44 : f32 to vector<32x256xf32>
    %116 = arith.cmpf ogt, %114, %115 : vector<32x256xf32>
    %cst_45 = arith.constant 0.00999999977 : f32
    %117 = vector.broadcast %cst_45 : f32 to vector<32x256xf32>
    %118 = arith.mulf %117, %114 : vector<32x256xf32>
    %119 = arith.select %116, %114, %118 : vector<32x256xi1>, vector<32x256xf32>
    %120 = arith.truncf %119 : vector<32x256xf32> to vector<32x256xbf16>
    %cst_46 = arith.constant dense<0.000000e+00> : vector<24x256xf32>
    %121 = tpu.matmul %10, %120, %cst_46 {dimension_numbers = #tpu.dot_dimension_numbers<[1], [0], [0], [1], [0, 0, 1, 1], [], []>} : vector<24x32xbf16>, vector<32x256xbf16>, vector<24x256xf32> -> vector<24x256xf32>
    %122 = vector.broadcast %11 : vector<24x1xf32> to vector<24x256xf32>
    %123 = arith.addf %121, %122 : vector<24x256xf32>
    %c0_47 = arith.constant 0 : index
    %124 = arith.index_cast %89 : i32 to index
    %125 = vector.load %arg3[%c0_47, %124] : memref<24x1024xf32, #tpu.memory_space<vmem>>, vector<24x256xf32>
    tpu.vector_store %arg3[%c0_47, %124], %123 {strides = array<i32>} : memref<24x1024xf32, #tpu.memory_space<vmem>>, vector<24x256xf32>,
    %c3_i32 = arith.constant 3 : i32
    %c256_i32_48 = arith.constant 256 : i32
    %126 = arith.muli %c3_i32, %c256_i32_48 : i32
    %127 = tpu.assume_multiple %126, 256 : i32
    %c0_49 = arith.constant 0 : index
    %128 = arith.index_cast %127 : i32 to index
    %129 = vector.load %arg1[%c0_49, %128] : memref<8x1024xf32, #tpu.memory_space<vmem>>, vector<8x256xf32>
    %130 = arith.truncf %129 : vector<8x256xf32> to vector<8x256xbf16>
    %cst_50 = arith.constant dense<0.000000e+00> : vector<32x256xf32>
    %131 = tpu.matmul %1, %130, %cst_50 {dimension_numbers = #tpu.dot_dimension_numbers<[1], [0], [0], [1], [0, 0, 1, 1], [], []>} : vector<32x8xbf16>, vector<8x256xbf16>, vector<32x256xf32> -> vector<32x256xf32>
    %132 = vector.broadcast %2 : vector<32x1xf32> to vector<32x256xf32>
    %133 = arith.addf %131, %132 : vector<32x256xf32>
    %cst_51 = arith.constant 0.000000e+00 : f32
    %134 = vector.broadcast %cst_51 : f32 to vector<32x256xf32>
    %135 = arith.cmpf ogt, %133, %134 : vector<32x256xf32>
    %cst_52 = arith.constant 0.00999999977 : f32
    %136 = vector.broadcast %cst_52 : f32 to vector<32x256xf32>
    %137 = arith.mulf %136, %133 : vector<32x256xf32>
    %138 = arith.select %135, %133, %137 : vector<32x256xi1>, vector<32x256xf32>
    %139 = arith.truncf %138 : vector<32x256xf32> to vector<32x256xbf16>
    %cst_53 = arith.constant dense<0.000000e+00> : vector<32x256xf32>
    %140 = tpu.matmul %4, %139, %cst_53 {dimension_numbers = #tpu.dot_dimension_numbers<[1], [0], [0], [1], [0, 0, 1, 1], [], []>} : vector<32x32xbf16>, vector<32x256xbf16>, vector<32x256xf32> -> vector<32x256xf32>
    %141 = vector.broadcast %5 : vector<32x1xf32> to vector<32x256xf32>
    %142 = arith.addf %140, %141 : vector<32x256xf32>
    %cst_54 = arith.constant 0.000000e+00 : f32
    %143 = vector.broadcast %cst_54 : f32 to vector<32x256xf32>
    %144 = arith.cmpf ogt, %142, %143 : vector<32x256xf32>
    %cst_55 = arith.constant 0.00999999977 : f32
    %145 = vector.broadcast %cst_55 : f32 to vector<32x256xf32>
    %146 = arith.mulf %145, %142 : vector<32x256xf32>
    %147 = arith.select %144, %142, %146 : vector<32x256xi1>, vector<32x256xf32>
    %148 = arith.truncf %147 : vector<32x256xf32> to vector<32x256xbf16>
    %149 = tpu.concatenate %148, %130 in 0 : vector<32x256xbf16>, vector<8x256xbf16> -> vector<40x256xbf16>
    %cst_56 = arith.constant dense<0.000000e+00> : vector<32x256xf32>
    %150 = tpu.matmul %7, %149, %cst_56 {dimension_numbers = #tpu.dot_dimension_numbers<[1], [0], [0], [1], [0, 0, 1, 1], [], []>} : vector<32x40xbf16>, vector<40x256xbf16>, vector<32x256xf32> -> vector<32x256xf32>
    %151 = vector.broadcast %8 : vector<32x1xf32> to vector<32x256xf32>
    %152 = arith.addf %150, %151 : vector<32x256xf32>
    %cst_57 = arith.constant 0.000000e+00 : f32
    %153 = vector.broadcast %cst_57 : f32 to vector<32x256xf32>
    %154 = arith.cmpf ogt, %152, %153 : vector<32x256xf32>
    %cst_58 = arith.constant 0.00999999977 : f32
    %155 = vector.broadcast %cst_58 : f32 to vector<32x256xf32>
    %156 = arith.mulf %155, %152 : vector<32x256xf32>
    %157 = arith.select %154, %152, %156 : vector<32x256xi1>, vector<32x256xf32>
    %158 = arith.truncf %157 : vector<32x256xf32> to vector<32x256xbf16>
    %cst_59 = arith.constant dense<0.000000e+00> : vector<24x256xf32>
    %159 = tpu.matmul %10, %158, %cst_59 {dimension_numbers = #tpu.dot_dimension_numbers<[1], [0], [0], [1], [0, 0, 1, 1], [], []>} : vector<24x32xbf16>, vector<32x256xbf16>, vector<24x256xf32> -> vector<24x256xf32>
    %160 = vector.broadcast %11 : vector<24x1xf32> to vector<24x256xf32>
    %161 = arith.addf %159, %160 : vector<24x256xf32>
    %c0_60 = arith.constant 0 : index
    %162 = arith.index_cast %127 : i32 to index
    %163 = vector.load %arg3[%c0_60, %162] : memref<24x1024xf32, #tpu.memory_space<vmem>>, vector<24x256xf32>
    tpu.vector_store %arg3[%c0_60, %162], %161 {strides = array<i32>} : memref<24x1024xf32, #tpu.memory_space<vmem>>, vector<24x256xf32>,
    %c4_i32 = arith.constant 4 : i32
    return
  }
  func.func @transform_0(%arg0: i32) -> (i32, i32) {
    %c0_i32 = arith.constant 0 : i32
    %c0_i32_0 = arith.constant 0 : i32
    return %c0_i32, %arg0 : i32, i32
  }
  func.func @transform_1(%arg0: i32) -> (i32, i32) {
    %c0_i32 = arith.constant 0 : i32
    %c0_i32_0 = arith.constant 0 : i32
    %c0_i32_1 = arith.constant 0 : i32
    return %c0_i32, %c0_i32_0 : i32, i32
  }
  func.func @transform_2(%arg0: i32) -> (i32, i32) {
    %c0_i32 = arith.constant 0 : i32
    %c0_i32_0 = arith.constant 0 : i32
    return %c0_i32, %arg0 : i32, i32
  }
}

</mosaic_0001>

<llo_original>
// kernel: forward.1
$region0: #{forward.1}
  #allocation0 [shape = 'u32[]', space=smem, size = 0x4, offset = 0x4, fixed_abs, tag = 'smem constant byte address 0x4 - core index']
  #allocation1 [shape = 'u32[144,128]{1,0:T(1,128)}', space=vmem, size = 0x12000, scoped, tag = 'internal scratch']
  %s0 = inlined_call_operand.vmem [shape: f32[8,2048], index: 0, kind: input, shape index: {}]
  %s1 = inlined_call_operand.vmem [shape: f32[120,41], index: 1, kind: input, shape index: {}]
  %s2 = inlined_call_operand.vmem [shape: f32[24,2048], index: 2, kind: output, shape index: {}]
  %s3 = sld [smem:[#allocation0]]
  $region60: #{forward.1} parent=0
    _
  %s5 = ssub.s32 1, %s3
  %s6 = scalar_select 0, %s5, %s3
  $region1: #{forward.1} parent=0
    #allocation2 [shape = 'u8[196608]{0}', space=vmem, size = 0x30000, scoped, tag = 'output window, operand 0']
    loop: start=0, step=1, limit=4
    $region2: #{forward.1} parent=1 // loop_pre_header
      _
    $region3: #{forward.1} parent=1 // loop_header
      %s8 = sphi 0, %s12
      %p9 = scmp.ge.s32.totalorder %s8, 4
      %s18 = sphi 0, %s20
      %s21 = sphi 0, %s18
      %s22 = sphi 0, %s21
      %s38 = sphi 0, %s22
      %s42 = sphi 0, %s42
      %s44 = sphi 0, %s42
      %s45 = sphi 0, %s44
      %s59 = sphi 0, %s45
      %s65 = sphi 0, %s67
      %s68 = sphi 0, %s65
      %s69 = sphi 0, %s68
      %s85 = sphi 0, %s69
    $region4: #{forward.1} parent=1 // loop_header_branch
      %11 = sbr.rel (%p9) target = $region8
    $region5: #{forward.1} parent=1 // loop_body
      %s13 = ssub.s32 %s8, 1
      %s14 = ssub.s32 %s8, 2
      %s15 = sadd.s32 %s8, 1
      %s16 = ssub.s32 %s8, %s15
      %p17 = scmp.eq.s32.totalorder %s16, 0
      %s19 = sadd.s32 %s18, 1
      %s20 = scalar_select %p17, %s18, %s19
      %p23 = pneg %p17
      %p24 = scmp.eq.s32.totalorder %s8, 1
      %p25 = por %p23, %p24
      %p26 = scmp.ne.s32.totalorder %s18, %s21
      %p27 = scmp.eq.s32.totalorder %s8, 0
      %p28 = por %p26, %p27
      %p29 = scmp.ne.s32.totalorder %s18, %s21
      %p30 = scmp.eq.s32.totalorder %s13, 1
      %p31 = por %p29, %p30
      %p32 = scmp.ne.s32.totalorder %s21, %s22
      %p33 = scmp.eq.s32.totalorder %s13, 0
      %p34 = por %p32, %p33
      %p35 = scmp.ne.s32.totalorder %s21, %s22
      %p36 = scmp.eq.s32.totalorder %s14, 1
      %p37 = por %p35, %p36
      %p39 = scmp.ne.s32.totalorder %s22, %s38
      %p40 = scmp.eq.s32.totalorder %s14, 0
      %p41 = por %p39, %p40
      %s43 = sadd.s32 %s42, 1
      %p46 = scmp.eq.s32.totalorder %s8, 1
      %p47 = scmp.ne.s32.totalorder %s42, %s44
      %p48 = scmp.eq.s32.totalorder %s8, 0
      %p49 = por %p47, %p48
      %p50 = scmp.ne.s32.totalorder %s42, %s44
      %p51 = scmp.eq.s32.totalorder %s13, 1
      %p52 = por %p50, %p51
      %p53 = scmp.ne.s32.totalorder %s44, %s45
      %p54 = scmp.eq.s32.totalorder %s13, 0
      %p55 = por %p53, %p54
      %p56 = scmp.ne.s32.totalorder %s44, %s45
      %p57 = scmp.eq.s32.totalorder %s14, 1
      %p58 = por %p56, %p57
      %p60 = scmp.ne.s32.totalorder %s45, %s59
      %p61 = scmp.eq.s32.totalorder %s14, 0
      %p62 = por %p60, %p61
      %s63 = ssub.s32 %s8, %s15
      %p64 = scmp.eq.s32.totalorder %s63, 0
      %s66 = sadd.s32 %s65, 1
      %s67 = scalar_select %p64, %s65, %s66
      %p70 = pneg %p64
      %p71 = scmp.eq.s32.totalorder %s8, 1
      %p72 = por %p70, %p71
      %p73 = scmp.ne.s32.totalorder %s65, %s68
      %p74 = scmp.eq.s32.totalorder %s8, 0
      %p75 = por %p73, %p74
      %p76 = scmp.ne.s32.totalorder %s65, %s68
      %p77 = scmp.eq.s32.totalorder %s13, 1
      %p78 = por %p76, %p77
      %p79 = scmp.ne.s32.totalorder %s68, %s69
      %p80 = scmp.eq.s32.totalorder %s13, 0
      %p81 = por %p79, %p80
      %p82 = scmp.ne.s32.totalorder %s68, %s69
      %p83 = scmp.eq.s32.totalorder %s14, 1
      %p84 = por %p82, %p83
      %p86 = scmp.ne.s32.totalorder %s69, %s85
      %p87 = scmp.eq.s32.totalorder %s14, 0
      %p88 = por %p86, %p87
      %p89 = scmp.le.s32.totalorder 1, %s8
      %p90 = scmp.lt.s32.totalorder %s8, 3
      %p91 = pnand %p89, %p90
      %p92 = pneg %p91
      // Predicated region
      $region9: #{forward.1} parent=5 // pred_check
        _
      $region10: #{forward.1} parent=5 // pred_check_branch
        %94 = sbr.rel (%p91) target = $region12
      $region11: #{forward.1} parent=5 // pred_region
        %s95 = ssub.s32 %s8, 1
        // Predicated region
        $region13: #{forward.1} parent=11 // pred_check
          %p96 = pneg %p55
        $region14: #{forward.1} parent=11 // pred_check_branch
          %98 = sbr.rel (%p96) target = $region16
        $region15: #{forward.1} parent=11 // pred_region
          _
        $region16: #{forward.1} parent=11 // pred_fallthru
          _
      $region12: #{forward.1} parent=5 // pred_fallthru
        _
      %p99 = scmp.lt.s32.totalorder %s8, 2
      // Predicated region
      $region17: #{forward.1} parent=5 // pred_check
        %p100 = pneg %p99
      $region18: #{forward.1} parent=5 // pred_check_branch
        %102 = sbr.rel (%p100) target = $region20
      $region19: #{forward.1} parent=5 // pred_region
        // Predicated region
        $region21: #{forward.1} parent=19 // pred_check
          %p103 = pneg %p28
        $region22: #{forward.1} parent=19 // pred_check_branch
          %105 = sbr.rel (%p103) target = $region24
        $region23: #{forward.1} parent=19 // pred_region
          %s106 = smul.u32 8, %s8
          %p107 = scmp.lt.s32.totalorder %s106, 15
          %s108 = scalar_select %p107, %s106, 15
          %s109 = smul.addr %s108, 8
          %s110 = scalar_lea.vmem %s0, %s109
          %s111 = smul.u32 8, %s8
        $region24: #{forward.1} parent=19 // pred_fallthru
          _
      $region20: #{forward.1} parent=5 // pred_fallthru
        _
      %p112 = scmp.le.s32.totalorder 1, %s8
      %p113 = scmp.lt.s32.totalorder %s8, 3
      %p114 = pnand %p112, %p113
      %p115 = pneg %p114
      // Predicated region
      $region25: #{forward.1} parent=5 // pred_check
        _
      $region26: #{forward.1} parent=5 // pred_check_branch
        %117 = sbr.rel (%p114) target = $region28
      $region27: #{forward.1} parent=5 // pred_region
        %s118 = ssub.s32 %s8, 1
        %s119 = smul.u32 8, %s13
        %p120 = scmp.lt.s32.totalorder %s119, 15
        %s121 = scalar_select %p120, %s119, 15
        %s122 = smul.addr %s121, 8
        %s123 = scalar_lea.vmem %s0, %s122
        %p124 = pneg %p34
        %p125 = pneg %p31
        %p126 = pneg %p55
        %p127 = pneg %p52
        %p128 = pneg %p81
        %p129 = pneg %p78
        %s130 = sand.u32 %s68, 1
        %s131 = sand.u32 %s68, 1
        %s132 = smul.addr %s131, 192
        %s133 = scalar_lea.vmem [#allocation2], %s132
        %s134 = smul.u32 8, %s13
        %p135 = scmp.lt.s32.totalorder %s134, 15
        %s136 = scalar_select %p135, %s134, 15
        %s137 = smul.addr %s136, 8
        %s138 = scalar_lea.vmem %s0, %s137
        %s139 = smul.u32 8, %s13
        %s140 = smul.u32 8, %s13
        %v142 = vld [vmem:[%s1] sm:$0xff]
        %v143 = vld [vmem:[%s1 + $0x8] sm:$0xff]
        %v144 = vld [vmem:[%s1 + $0x10] sm:$0xff]
        %v145 = vld [vmem:[%s1 + $0x18] sm:$0xff]
        %v146 = vpack.c.bf16 %v143, %v142
        %v147 = vpack.c.bf16 %v145, %v144
        %v148 = vld [vmem:[%s1 + $0x20] sm:$0xff]
        %v149 = vld [vmem:[%s1 + $0x28] sm:$0xff]
        %v150 = vld [vmem:[%s1 + $0x30] sm:$0xff]
        %v151 = vld [vmem:[%s1 + $0x38] sm:$0xff]
        %v152 = vpack.c.bf16 %v149, %v148
        %v153 = vpack.c.bf16 %v151, %v150
        %v154 = vld [vmem:[%s1 + $0x40] sm:$0xff]
        %v155 = vld [vmem:[%s1 + $0x48] sm:$0xff]
        %v156 = vld [vmem:[%s1 + $0x50] sm:$0xff]
        %v157 = vld [vmem:[%s1 + $0x58] sm:$0xff]
        %v158 = vpack.c.bf16 %v155, %v154
        %v159 = vpack.c.bf16 %v157, %v156
        %v160 = vld [vmem:[%s1 + $0x60] sm:$0xff]
        %v161 = vld [vmem:[%s1 + $0x68] sm:$0xff]
        %v162 = vld [vmem:[%s1 + $0x70] sm:$0xff]
        %v163 = vpack.c.bf16 %v161, %v160
        %v164 = vpack.c.bf16 %v162, %v162
        %v165 = vld [vmem:[%s138] sm:$0xff]
        %v166 = vld [vmem:[%s138 + $0x8] sm:$0xff]
        %v167 = vpack.c.bf16 %v165, %v165
        %v168 = vpack.c.bf16 %v166, %v166
        %170 = vset.pattern.permute.xlu0 40
        %171 = vperm.xlu0 %170, %v142
        %v172 = vpop.permute.xlu0 %171
        %175 = vset.pattern.permute.xlu0 40
        %176 = vperm.xlu0 %175, %v143
        %v177 = vpop.permute.xlu0 %176
        %180 = vset.pattern.permute.xlu0 40
        %181 = vperm.xlu0 %180, %v144
        %v182 = vpop.permute.xlu0 %181
        %185 = vset.pattern.permute.xlu0 40
        %186 = vperm.xlu0 %185, %v145
        %v187 = vpop.permute.xlu0 %186
        %vm189 = vcmask 64512
        %v191 = vsel %vm189, %v146, 0
        %v194 = vsel %vm189, %v147, 0
        %vm196 = vcmask 1043456
        %v198 = vsel %vm196, %v167, 0
        %v201 = vsel %vm196, %v168, 0
        %203 = vmatprep.subr.bf16.mxu0 %v201
        %204 = vmatpush1.bf16.msra.mxu0 %v198
        %205 = vmatprep.subr.bf16.mxu0 0
        %206 = vmatpush1.bf16.msra.mxu0 0
        %207 = vmatprep.subr.bf16.mxu0 0
        %208 = vmatpush1.bf16.msra.mxu0 0
        %209 = vmatprep.subr.bf16.mxu0 0
        %210 = vmatpush1.bf16.msra.mxu0 0
        %211 = vmatprep.subr.bf16.mxu0 0
        %212 = vmatpush1.bf16.msra.mxu0 0
        %213 = vmatprep.subr.bf16.mxu0 0
        %214 = vmatpush1.bf16.msra.mxu0 0
        %215 = vmatprep.subr.bf16.mxu0 0
        %216 = vmatpush1.bf16.msra.mxu0 0
        %217 = vmatprep.subr.bf16.mxu0 0
        %218 = vmatpush1.bf16.msra.mxu0 0
        %219 = vmatprep.subr.bf16.mxu0 0
        %220 = vmatpush1.bf16.msra.mxu0 0
        %221 = vmatprep.subr.bf16.mxu0 0
        %222 = vmatpush1.bf16.msra.mxu0 0
        %223 = vmatprep.subr.bf16.mxu0 0
        %224 = vmatpush1.bf16.msra.mxu0 0
        %225 = vmatprep.subr.bf16.mxu0 0
        %226 = vmatpush1.bf16.msra.mxu0 0
        %227 = vmatprep.subr.bf16.mxu0 0
        %228 = vmatpush1.bf16.msra.mxu0 0
        %229 = vmatprep.subr.bf16.mxu0 0
        %230 = vmatpush1.bf16.msra.mxu0 0
        %231 = vmatprep.subr.bf16.mxu0 0
        %232 = vmatpush1.bf16.msra.mxu0 0
        %233 = vmatprep.subr.bf16.mxu0 0
        %234 = vmatpush1.bf16.msra.mxu0 0
        %235 = vmatprep.mubr.bf16.mxu0 0
        %236 = vmatmul.mubr.bf16.gmra.mrb[0].mxu0 %v191
        %v237 = vpop.f32.mrb[0].mxu0
        %v238 = vadd.f32 %v172, %v237
        %v239 = vpop.f32.mrb[0].mxu0
        %v240 = vadd.f32 %v172, %v239
        %v241 = vpop.f32.mrb[0].mxu0
        %v242 = vadd.f32 %v177, %v241
        %v243 = vpop.f32.mrb[0].mxu0
        %v244 = vadd.f32 %v177, %v243
        %245 = vmatprep.mubr.bf16.mxu0 0
        %246 = vmatmul.mubr.bf16.gmra.mrb[0].mxu0 %v194
        %v247 = vpop.f32.mrb[0].mxu0
        %v248 = vadd.f32 %v182, %v247
        %v249 = vpop.f32.mrb[0].mxu0
        %v250 = vadd.f32 %v182, %v249
        %v251 = vpop.f32.mrb[0].mxu0
        %v252 = vadd.f32 %v187, %v251
        %v253 = vpop.f32.mrb[0].mxu0
        %v254 = vadd.f32 %v187, %v253
        %255 = vdwg.mxu0
        %vm256 = vcmp.gt.f32.partialorder %v238, 0.0
        %vm257 = vcmp.gt.f32.partialorder %v240, 0.0
        %vm258 = vcmp.gt.f32.partialorder %v242, 0.0
        %vm259 = vcmp.gt.f32.partialorder %v244, 0.0
        %vm260 = vcmp.gt.f32.partialorder %v248, 0.0
        %vm261 = vcmp.gt.f32.partialorder %v250, 0.0
        %vm262 = vcmp.gt.f32.partialorder %v252, 0.0
        %vm263 = vcmp.gt.f32.partialorder %v254, 0.0
        %v264 = vmul.f32 %v238, 0.01
        %v265 = vmul.f32 %v240, 0.01
        %v266 = vmul.f32 %v242, 0.01
        %v267 = vmul.f32 %v244, 0.01
        %v268 = vmul.f32 %v248, 0.01
        %v269 = vmul.f32 %v250, 0.01
        %v270 = vmul.f32 %v252, 0.01
        %v271 = vmul.f32 %v254, 0.01
        %v272 = vsel %vm256, %v238, %v264
        %v273 = vsel %vm257, %v240, %v265
        %v274 = vsel %vm258, %v242, %v266
        %v275 = vsel %vm259, %v244, %v267
        %v276 = vsel %vm260, %v248, %v268
        %v277 = vsel %vm261, %v250, %v269
        %v278 = vsel %vm262, %v252, %v270
        %v279 = vsel %vm263, %v254, %v271
        %v280 = vpack.c.bf16 %v274, %v272
        %v281 = vpack.c.bf16 %v275, %v273
        %v282 = vpack.c.bf16 %v278, %v276
        %v283 = vpack.c.bf16 %v279, %v277
        %285 = vset.pattern.permute.xlu0 40
        %286 = vperm.xlu0 %285, %v148
        %v287 = vpop.permute.xlu0 %286
        %290 = vset.pattern.permute.xlu0 40
        %291 = vperm.xlu0 %290, %v149
        %v292 = vpop.permute.xlu0 %291
        %295 = vset.pattern.permute.xlu0 40
        %296 = vperm.xlu0 %295, %v150
        %v297 = vpop.permute.xlu0 %296
        %300 = vset.pattern.permute.xlu0 40
        %301 = vperm.xlu0 %300, %v151
        %v302 = vpop.permute.xlu0 %301
        %vm304 = vcmask 261120
        %v306 = vsel %vm304, %v152, 0
        %v309 = vsel %vm304, %v153, 0
        %311 = vmatprep.subr.bf16.mxu0 %v281
        %312 = vmatpush1.bf16.msra.mxu0 %v280
        %313 = vmatprep.subr.bf16.mxu0 %v283
        %314 = vmatpush1.bf16.msra.mxu0 %v282
        %315 = vmatprep.subr.bf16.mxu0 0
        %316 = vmatpush1.bf16.msra.mxu0 0
        %317 = vmatprep.subr.bf16.mxu0 0
        %318 = vmatpush1.bf16.msra.mxu0 0
        %319 = vmatprep.subr.bf16.mxu0 0
        %320 = vmatpush1.bf16.msra.mxu0 0
        %321 = vmatprep.subr.bf16.mxu0 0
        %322 = vmatpush1.bf16.msra.mxu0 0
        %323 = vmatprep.subr.bf16.mxu0 0
        %324 = vmatpush1.bf16.msra.mxu0 0
        %325 = vmatprep.subr.bf16.mxu0 0
        %326 = vmatpush1.bf16.msra.mxu0 0
        %327 = vmatprep.subr.bf16.mxu0 0
        %328 = vmatpush1.bf16.msra.mxu0 0
        %329 = vmatprep.subr.bf16.mxu0 0
        %330 = vmatpush1.bf16.msra.mxu0 0
        %331 = vmatprep.subr.bf16.mxu0 0
        %332 = vmatpush1.bf16.msra.mxu0 0
        %333 = vmatprep.subr.bf16.mxu0 0
        %334 = vmatpush1.bf16.msra.mxu0 0
        %335 = vmatprep.subr.bf16.mxu0 0
        %336 = vmatpush1.bf16.msra.mxu0 0
        %337 = vmatprep.subr.bf16.mxu0 0
        %338 = vmatpush1.bf16.msra.mxu0 0
        %339 = vmatprep.subr.bf16.mxu0 0
        %340 = vmatpush1.bf16.msra.mxu0 0
        %341 = vmatprep.subr.bf16.mxu0 0
        %342 = vmatpush1.bf16.msra.mxu0 0
        %343 = vmatprep.mubr.bf16.mxu0 0
        %344 = vmatmul.mubr.bf16.gmra.mrb[0].mxu0 %v306
        %v345 = vpop.f32.mrb[0].mxu0
        %v346 = vadd.f32 %v287, %v345
        %v347 = vpop.f32.mrb[0].mxu0
        %v348 = vadd.f32 %v287, %v347
        %v349 = vpop.f32.mrb[0].mxu0
        %v350 = vadd.f32 %v292, %v349
        %v351 = vpop.f32.mrb[0].mxu0
        %v352 = vadd.f32 %v292, %v351
        %353 = vmatprep.mubr.bf16.mxu0 0
        %354 = vmatmul.mubr.bf16.gmra.mrb[0].mxu0 %v309
        %v355 = vpop.f32.mrb[0].mxu0
        %v356 = vadd.f32 %v297, %v355
        %v357 = vpop.f32.mrb[0].mxu0
        %v358 = vadd.f32 %v297, %v357
        %v359 = vpop.f32.mrb[0].mxu0
        %v360 = vadd.f32 %v302, %v359
        %v361 = vpop.f32.mrb[0].mxu0
        %v362 = vadd.f32 %v302, %v361
        %363 = vdwg.mxu0
        %vm364 = vcmp.gt.f32.partialorder %v346, 0.0
        %vm365 = vcmp.gt.f32.partialorder %v348, 0.0
        %vm366 = vcmp.gt.f32.partialorder %v350, 0.0
        %vm367 = vcmp.gt.f32.partialorder %v352, 0.0
        %vm368 = vcmp.gt.f32.partialorder %v356, 0.0
        %vm369 = vcmp.gt.f32.partialorder %v358, 0.0
        %vm370 = vcmp.gt.f32.partialorder %v360, 0.0
        %vm371 = vcmp.gt.f32.partialorder %v362, 0.0
        %v372 = vmul.f32 %v346, 0.01
        %v373 = vmul.f32 %v348, 0.01
        %v374 = vmul.f32 %v350, 0.01
        %v375 = vmul.f32 %v352, 0.01
        %v376 = vmul.f32 %v356, 0.01
        %v377 = vmul.f32 %v358, 0.01
        %v378 = vmul.f32 %v360, 0.01
        %v379 = vmul.f32 %v362, 0.01
        %v380 = vsel %vm364, %v346, %v372
        %v381 = vsel %vm365, %v348, %v373
        %v382 = vsel %vm366, %v350, %v374
        %v383 = vsel %vm367, %v352, %v375
        %v384 = vsel %vm368, %v356, %v376
        %v385 = vsel %vm369, %v358, %v377
        %v386 = vsel %vm370, %v360, %v378
        %v387 = vsel %vm371, %v362, %v379
        %v388 = vpack.c.bf16 %v382, %v380
        %v389 = vpack.c.bf16 %v383, %v381
        %v390 = vpack.c.bf16 %v386, %v384
        %v391 = vpack.c.bf16 %v387, %v385
        %393 = vset.pattern.permute.xlu0 40
        %394 = vperm.xlu0 %393, %v154
        %v395 = vpop.permute.xlu0 %394
        %398 = vset.pattern.permute.xlu0 40
        %399 = vperm.xlu0 %398, %v155
        %v400 = vpop.permute.xlu0 %399
        %403 = vset.pattern.permute.xlu0 40
        %404 = vperm.xlu0 %403, %v156
        %v405 = vpop.permute.xlu0 %404
        %408 = vset.pattern.permute.xlu0 40
        %409 = vperm.xlu0 %408, %v157
        %v410 = vpop.permute.xlu0 %409
        %vm412 = vcmask 326656
        %v414 = vsel %vm412, %v158, 0
        %v417 = vsel %vm412, %v159, 0
        %419 = vmatprep.subr.bf16.mxu0 %v389
        %420 = vmatpush1.bf16.msra.mxu0 %v388
        %421 = vmatprep.subr.bf16.mxu0 %v391
        %422 = vmatpush1.bf16.msra.mxu0 %v390
        %423 = vmatprep.subr.bf16.mxu0 %v201
        %424 = vmatpush1.bf16.msra.mxu0 %v198
        %425 = vmatprep.subr.bf16.mxu0 0
        %426 = vmatpush1.bf16.msra.mxu0 0
        %427 = vmatprep.subr.bf16.mxu0 0
        %428 = vmatpush1.bf16.msra.mxu0 0
        %429 = vmatprep.subr.bf16.mxu0 0
        %430 = vmatpush1.bf16.msra.mxu0 0
        %431 = vmatprep.subr.bf16.mxu0 0
        %432 = vmatpush1.bf16.msra.mxu0 0
        %433 = vmatprep.subr.bf16.mxu0 0
        %434 = vmatpush1.bf16.msra.mxu0 0
        %435 = vmatprep.subr.bf16.mxu0 0
        %436 = vmatpush1.bf16.msra.mxu0 0
        %437 = vmatprep.subr.bf16.mxu0 0
        %438 = vmatpush1.bf16.msra.mxu0 0
        %439 = vmatprep.subr.bf16.mxu0 0
        %440 = vmatpush1.bf16.msra.mxu0 0
        %441 = vmatprep.subr.bf16.mxu0 0
        %442 = vmatpush1.bf16.msra.mxu0 0
        %443 = vmatprep.subr.bf16.mxu0 0
        %444 = vmatpush1.bf16.msra.mxu0 0
        %445 = vmatprep.subr.bf16.mxu0 0
        %446 = vmatpush1.bf16.msra.mxu0 0
        %447 = vmatprep.subr.bf16.mxu0 0
        %448 = vmatpush1.bf16.msra.mxu0 0
        %449 = vmatprep.subr.bf16.mxu0 0
        %450 = vmatpush1.bf16.msra.mxu0 0
        %451 = vmatprep.mubr.bf16.mxu0 0
        %452 = vmatmul.mubr.bf16.gmra.mrb[0].mxu0 %v414
        %v453 = vpop.f32.mrb[0].mxu0
        %v454 = vadd.f32 %v395, %v453
        %v455 = vpop.f32.mrb[0].mxu0
        %v456 = vadd.f32 %v395, %v455
        %v457 = vpop.f32.mrb[0].mxu0
        %v458 = vadd.f32 %v400, %v457
        %v459 = vpop.f32.mrb[0].mxu0
        %v460 = vadd.f32 %v400, %v459
        %461 = vmatprep.mubr.bf16.mxu0 0
        %462 = vmatmul.mubr.bf16.gmra.mrb[0].mxu0 %v417
        %v463 = vpop.f32.mrb[0].mxu0
        %v464 = vadd.f32 %v405, %v463
        %v465 = vpop.f32.mrb[0].mxu0
        %v466 = vadd.f32 %v405, %v465
        %v467 = vpop.f32.mrb[0].mxu0
        %v468 = vadd.f32 %v410, %v467
        %v469 = vpop.f32.mrb[0].mxu0
        %v470 = vadd.f32 %v410, %v469
        %471 = vdwg.mxu0
        %vm472 = vcmp.gt.f32.partialorder %v454, 0.0
        %vm473 = vcmp.gt.f32.partialorder %v456, 0.0
        %vm474 = vcmp.gt.f32.partialorder %v458, 0.0
        %vm475 = vcmp.gt.f32.partialorder %v460, 0.0
        %vm476 = vcmp.gt.f32.partialorder %v464, 0.0
        %vm477 = vcmp.gt.f32.partialorder %v466, 0.0
        %vm478 = vcmp.gt.f32.partialorder %v468, 0.0
        %vm479 = vcmp.gt.f32.partialorder %v470, 0.0
        %v480 = vmul.f32 %v454, 0.01
        %v481 = vmul.f32 %v456, 0.01
        %v482 = vmul.f32 %v458, 0.01
        %v483 = vmul.f32 %v460, 0.01
        %v484 = vmul.f32 %v464, 0.01
        %v485 = vmul.f32 %v466, 0.01
        %v486 = vmul.f32 %v468, 0.01
        %v487 = vmul.f32 %v470, 0.01
        %v488 = vsel %vm472, %v454, %v480
        %v489 = vsel %vm473, %v456, %v481
        %v490 = vsel %vm474, %v458, %v482
        %v491 = vsel %vm475, %v460, %v483
        %v492 = vsel %vm476, %v464, %v484
        %v493 = vsel %vm477, %v466, %v485
        %v494 = vsel %vm478, %v468, %v486
        %v495 = vsel %vm479, %v470, %v487
        %v496 = vpack.c.bf16 %v490, %v488
        %v497 = vpack.c.bf16 %v491, %v489
        %v498 = vpack.c.bf16 %v494, %v492
        %v499 = vpack.c.bf16 %v495, %v493
        %501 = vset.pattern.permute.xlu0 40
        %502 = vperm.xlu0 %501, %v160
        %v503 = vpop.permute.xlu0 %502
        %506 = vset.pattern.permute.xlu0 40
        %507 = vperm.xlu0 %506, %v161
        %v508 = vpop.permute.xlu0 %507
        %511 = vset.pattern.permute.xlu0 40
        %512 = vperm.xlu0 %511, %v162
        %v513 = vpop.permute.xlu0 %512
        %v516 = vsel %vm304, %v163, 0
        %v519 = vsel %vm304, %v164, 0
        %521 = vmatprep.subr.bf16.mxu0 %v497
        %522 = vmatpush1.bf16.msra.mxu0 %v496
        %523 = vmatprep.subr.bf16.mxu0 %v499
        %524 = vmatpush1.bf16.msra.mxu0 %v498
        %525 = vmatprep.subr.bf16.mxu0 0
        %526 = vmatpush1.bf16.msra.mxu0 0
        %527 = vmatprep.subr.bf16.mxu0 0
        %528 = vmatpush1.bf16.msra.mxu0 0
        %529 = vmatprep.subr.bf16.mxu0 0
        %530 = vmatpush1.bf16.msra.mxu0 0
        %531 = vmatprep.subr.bf16.mxu0 0
        %532 = vmatpush1.bf16.msra.mxu0 0
        %533 = vmatprep.subr.bf16.mxu0 0
        %534 = vmatpush1.bf16.msra.mxu0 0
        %535 = vmatprep.subr.bf16.mxu0 0
        %536 = vmatpush1.bf16.msra.mxu0 0
        %537 = vmatprep.subr.bf16.mxu0 0
        %538 = vmatpush1.bf16.msra.mxu0 0
        %539 = vmatprep.subr.bf16.mxu0 0
        %540 = vmatpush1.bf16.msra.mxu0 0
        %541 = vmatprep.subr.bf16.mxu0 0
        %542 = vmatpush1.bf16.msra.mxu0 0
        %543 = vmatprep.subr.bf16.mxu0 0
        %544 = vmatpush1.bf16.msra.mxu0 0
        %545 = vmatprep.subr.bf16.mxu0 0
        %546 = vmatpush1.bf16.msra.mxu0 0
        %547 = vmatprep.subr.bf16.mxu0 0
        %548 = vmatpush1.bf16.msra.mxu0 0
        %549 = vmatprep.subr.bf16.mxu0 0
        %550 = vmatpush1.bf16.msra.mxu0 0
        %551 = vmatprep.subr.bf16.mxu0 0
        %552 = vmatpush1.bf16.msra.mxu0 0
        %553 = vmatprep.mubr.bf16.mxu0 0
        %554 = vmatmul.mubr.bf16.gmra.mrb[0].mxu0 %v516
        %v555 = vpop.f32.mrb[0].mxu0
        %v556 = vadd.f32 %v503, %v555
        %v557 = vpop.f32.mrb[0].mxu0
        %v558 = vadd.f32 %v503, %v557
        %v559 = vpop.f32.mrb[0].mxu0
        %v560 = vadd.f32 %v508, %v559
        %v561 = vpop.f32.mrb[0].mxu0
        %v562 = vadd.f32 %v508, %v561
        %563 = vmatprep.mubr.bf16.mxu0 0
        %564 = vmatmul.mubr.bf16.gmra.mrb[0].mxu0 %v519
        %v565 = vpop.f32.mrb[0].mxu0
        %v566 = vadd.f32 %v513, %v565
        %v567 = vpop.f32.mrb[0].mxu0
        %v568 = vadd.f32 %v513, %v567
        %v569 = vpop.f32.mrb[0].mxu0
        %v570 = vpop.f32.mrb[0].mxu0
        %571 = vdwg.mxu0
        %572 = vst [vmem:[%s133] sm:$0xff] %v556
        %573 = vst [vmem:[%s133 + $0x8] sm:$0xff] %v558
        %574 = vst [vmem:[%s133 + $0x40] sm:$0xff] %v560
        %575 = vst [vmem:[%s133 + $0x48] sm:$0xff] %v562
        %576 = vst [vmem:[%s133 + $0x80] sm:$0xff] %v566
        %577 = vst [vmem:[%s133 + $0x88] sm:$0xff] %v568
        %s578 = scalar_lea.vmem %s138, 16
        %v579 = vld [vmem:[%s578] sm:$0xff]
        %v580 = vld [vmem:[%s578 + $0x8] sm:$0xff]
        %v581 = vpack.c.bf16 %v579, %v579
        %v582 = vpack.c.bf16 %v580, %v580
        %v584 = vsel %vm196, %v581, 0
        %v587 = vsel %vm196, %v582, 0
        %589 = vmatprep.subr.bf16.mxu0 %v587
        %590 = vmatpush1.bf16.msra.mxu0 %v584
        %591 = vmatprep.subr.bf16.mxu0 0
        %592 = vmatpush1.bf16.msra.mxu0 0
        %593 = vmatprep.subr.bf16.mxu0 0
        %594 = vmatpush1.bf16.msra.mxu0 0
        %595 = vmatprep.subr.bf16.mxu0 0
        %596 = vmatpush1.bf16.msra.mxu0 0
        %597 = vmatprep.subr.bf16.mxu0 0
        %598 = vmatpush1.bf16.msra.mxu0 0
        %599 = vmatprep.subr.bf16.mxu0 0
        %600 = vmatpush1.bf16.msra.mxu0 0
        %601 = vmatprep.subr.bf16.mxu0 0
        %602 = vmatpush1.bf16.msra.mxu0 0
        %603 = vmatprep.subr.bf16.mxu0 0
        %604 = vmatpush1.bf16.msra.mxu0 0
        %605 = vmatprep.subr.bf16.mxu0 0
        %606 = vmatpush1.bf16.msra.mxu0 0
        %607 = vmatprep.subr.bf16.mxu0 0
        %608 = vmatpush1.bf16.msra.mxu0 0
        %609 = vmatprep.subr.bf16.mxu0 0
        %610 = vmatpush1.bf16.msra.mxu0 0
        %611 = vmatprep.subr.bf16.mxu0 0
        %612 = vmatpush1.bf16.msra.mxu0 0
        %613 = vmatprep.subr.bf16.mxu0 0
        %614 = vmatpush1.bf16.msra.mxu0 0
        %615 = vmatprep.subr.bf16.mxu0 0
        %616 = vmatpush1.bf16.msra.mxu0 0
        %617 = vmatprep.subr.bf16.mxu0 0
        %618 = vmatpush1.bf16.msra.mxu0 0
        %619 = vmatprep.subr.bf16.mxu0 0
        %620 = vmatpush1.bf16.msra.mxu0 0
        %621 = vmatprep.mubr.bf16.mxu0 0
        %622 = vmatmul.mubr.bf16.gmra.mrb[0].mxu0 %v191
        %v623 = vpop.f32.mrb[0].mxu0
        %v624 = vadd.f32 %v172, %v623
        %v625 = vpop.f32.mrb[0].mxu0
        %v626 = vadd.f32 %v172, %v625
        %v627 = vpop.f32.mrb[0].mxu0
        %v628 = vadd.f32 %v177, %v627
        %v629 = vpop.f32.mrb[0].mxu0
        %v630 = vadd.f32 %v177, %v629
        %631 = vmatprep.mubr.bf16.mxu0 0
        %632 = vmatmul.mubr.bf16.gmra.mrb[0].mxu0 %v194
        %v633 = vpop.f32.mrb[0].mxu0
        %v634 = vadd.f32 %v182, %v633
        %v635 = vpop.f32.mrb[0].mxu0
        %v636 = vadd.f32 %v182, %v635
        %v637 = vpop.f32.mrb[0].mxu0
        %v638 = vadd.f32 %v187, %v637
        %v639 = vpop.f32.mrb[0].mxu0
        %v640 = vadd.f32 %v187, %v639
        %641 = vdwg.mxu0
        %vm642 = vcmp.gt.f32.partialorder %v624, 0.0
        %vm643 = vcmp.gt.f32.partialorder %v626, 0.0
        %vm644 = vcmp.gt.f32.partialorder %v628, 0.0
        %vm645 = vcmp.gt.f32.partialorder %v630, 0.0
        %vm646 = vcmp.gt.f32.partialorder %v634, 0.0
        %vm647 = vcmp.gt.f32.partialorder %v636, 0.0
        %vm648 = vcmp.gt.f32.partialorder %v638, 0.0
        %vm649 = vcmp.gt.f32.partialorder %v640, 0.0
        %v650 = vmul.f32 %v624, 0.01
        %v651 = vmul.f32 %v626, 0.01
        %v652 = vmul.f32 %v628, 0.01
        %v653 = vmul.f32 %v630, 0.01
        %v654 = vmul.f32 %v634, 0.01
        %v655 = vmul.f32 %v636, 0.01
        %v656 = vmul.f32 %v638, 0.01
        %v657 = vmul.f32 %v640, 0.01
        %v658 = vsel %vm642, %v624, %v650
        %v659 = vsel %vm643, %v626, %v651
        %v660 = vsel %vm644, %v628, %v652
        %v661 = vsel %vm645, %v630, %v653
        %v662 = vsel %vm646, %v634, %v654
        %v663 = vsel %vm647, %v636, %v655
        %v664 = vsel %vm648, %v638, %v656
        %v665 = vsel %vm649, %v640, %v657
        %v666 = vpack.c.bf16 %v660, %v658
        %v667 = vpack.c.bf16 %v661, %v659
        %v668 = vpack.c.bf16 %v664, %v662
        %v669 = vpack.c.bf16 %v665, %v663
        %670 = vmatprep.subr.bf16.mxu0 %v667
        %671 = vmatpush1.bf16.msra.mxu0 %v666
        %672 = vmatprep.subr.bf16.mxu0 %v669
        %673 = vmatpush1.bf16.msra.mxu0 %v668
        %674 = vmatprep.subr.bf16.mxu0 0
        %675 = vmatpush1.bf16.msra.mxu0 0
        %676 = vmatprep.subr.bf16.mxu0 0
        %677 = vmatpush1.bf16.msra.mxu0 0
        %678 = vmatprep.subr.bf16.mxu0 0
        %679 = vmatpush1.bf16.msra.mxu0 0
        %680 = vmatprep.subr.bf16.mxu0 0
        %681 = vmatpush1.bf16.msra.mxu0 0
        %682 = vmatprep.subr.bf16.mxu0 0
        %683 = vmatpush1.bf16.msra.mxu0 0
        %684 = vmatprep.subr.bf16.mxu0 0
        %685 = vmatpush1.bf16.msra.mxu0 0
        %686 = vmatprep.subr.bf16.mxu0 0
        %687 = vmatpush1.bf16.msra.mxu0 0
        %688 = vmatprep.subr.bf16.mxu0 0
        %689 = vmatpush1.bf16.msra.mxu0 0
        %690 = vmatprep.subr.bf16.mxu0 0
        %691 = vmatpush1.bf16.msra.mxu0 0
        %692 = vmatprep.subr.bf16.mxu0 0
        %693 = vmatpush1.bf16.msra.mxu0 0
        %694 = vmatprep.subr.bf16.mxu0 0
        %695 = vmatpush1.bf16.msra.mxu0 0
        %696 = vmatprep.subr.bf16.mxu0 0
        %697 = vmatpush1.bf16.msra.mxu0 0
        %698 = vmatprep.subr.bf16.mxu0 0
        %699 = vmatpush1.bf16.msra.mxu0 0
        %700 = vmatprep.subr.bf16.mxu0 0
        %701 = vmatpush1.bf16.msra.mxu0 0
        %702 = vmatprep.mubr.bf16.mxu0 0
        %703 = vmatmul.mubr.bf16.gmra.mrb[0].mxu0 %v306
        %v704 = vpop.f32.mrb[0].mxu0
        %v705 = vadd.f32 %v287, %v704
        %v706 = vpop.f32.mrb[0].mxu0
        %v707 = vadd.f32 %v287, %v706
        %v708 = vpop.f32.mrb[0].mxu0
        %v709 = vadd.f32 %v292, %v708
        %v710 = vpop.f32.mrb[0].mxu0
        %v711 = vadd.f32 %v292, %v710
        %712 = vmatprep.mubr.bf16.mxu0 0
        %713 = vmatmul.mubr.bf16.gmra.mrb[0].mxu0 %v309
        %v714 = vpop.f32.mrb[0].mxu0
        %v715 = vadd.f32 %v297, %v714
        %v716 = vpop.f32.mrb[0].mxu0
        %v717 = vadd.f32 %v297, %v716
        %v718 = vpop.f32.mrb[0].mxu0
        %v719 = vadd.f32 %v302, %v718
        %v720 = vpop.f32.mrb[0].mxu0
        %v721 = vadd.f32 %v302, %v720
        %722 = vdwg.mxu0
        %vm723 = vcmp.gt.f32.partialorder %v705, 0.0
        %vm724 = vcmp.gt.f32.partialorder %v707, 0.0
        %vm725 = vcmp.gt.f32.partialorder %v709, 0.0
        %vm726 = vcmp.gt.f32.partialorder %v711, 0.0
        %vm727 = vcmp.gt.f32.partialorder %v715, 0.0
        %vm728 = vcmp.gt.f32.partialorder %v717, 0.0
        %vm729 = vcmp.gt.f32.partialorder %v719, 0.0
        %vm730 = vcmp.gt.f32.partialorder %v721, 0.0
        %v731 = vmul.f32 %v705, 0.01
        %v732 = vmul.f32 %v707, 0.01
        %v733 = vmul.f32 %v709, 0.01
        %v734 = vmul.f32 %v711, 0.01
        %v735 = vmul.f32 %v715, 0.01
        %v736 = vmul.f32 %v717, 0.01
        %v737 = vmul.f32 %v719, 0.01
        %v738 = vmul.f32 %v721, 0.01
        %v739 = vsel %vm723, %v705, %v731
        %v740 = vsel %vm724, %v707, %v732
        %v741 = vsel %vm725, %v709, %v733
        %v742 = vsel %vm726, %v711, %v734
        %v743 = vsel %vm727, %v715, %v735
        %v744 = vsel %vm728, %v717, %v736
        %v745 = vsel %vm729, %v719, %v737
        %v746 = vsel %vm730, %v721, %v738
        %v747 = vpack.c.bf16 %v741, %v739
        %v748 = vpack.c.bf16 %v742, %v740
        %v749 = vpack.c.bf16 %v745, %v743
        %v750 = vpack.c.bf16 %v746, %v744
        %751 = vmatprep.subr.bf16.mxu0 %v748
        %752 = vmatpush1.bf16.msra.mxu0 %v747
        %753 = vmatprep.subr.bf16.mxu0 %v750
        %754 = vmatpush1.bf16.msra.mxu0 %v749
        %755 = vmatprep.subr.bf16.mxu0 %v587
        %756 = vmatpush1.bf16.msra.mxu0 %v584
        %757 = vmatprep.subr.bf16.mxu0 0
        %758 = vmatpush1.bf16.msra.mxu0 0
        %759 = vmatprep.subr.bf16.mxu0 0
        %760 = vmatpush1.bf16.msra.mxu0 0
        %761 = vmatprep.subr.bf16.mxu0 0
        %762 = vmatpush1.bf16.msra.mxu0 0
        %763 = vmatprep.subr.bf16.mxu0 0
        %764 = vmatpush1.bf16.msra.mxu0 0
        %765 = vmatprep.subr.bf16.mxu0 0
        %766 = vmatpush1.bf16.msra.mxu0 0
        %767 = vmatprep.subr.bf16.mxu0 0
        %768 = vmatpush1.bf16.msra.mxu0 0
        %769 = vmatprep.subr.bf16.mxu0 0
        %770 = vmatpush1.bf16.msra.mxu0 0
        %771 = vmatprep.subr.bf16.mxu0 0
        %772 = vmatpush1.bf16.msra.mxu0 0
        %773 = vmatprep.subr.bf16.mxu0 0
        %774 = vmatpush1.bf16.msra.mxu0 0
        %775 = vmatprep.subr.bf16.mxu0 0
        %776 = vmatpush1.bf16.msra.mxu0 0
        %777 = vmatprep.subr.bf16.mxu0 0
        %778 = vmatpush1.bf16.msra.mxu0 0
        %779 = vmatprep.subr.bf16.mxu0 0
        %780 = vmatpush1.bf16.msra.mxu0 0
        %781 = vmatprep.subr.bf16.mxu0 0
        %782 = vmatpush1.bf16.msra.mxu0 0
        %783 = vmatprep.mubr.bf16.mxu0 0
        %784 = vmatmul.mubr.bf16.gmra.mrb[0].mxu0 %v414
        %v785 = vpop.f32.mrb[0].mxu0
        %v786 = vadd.f32 %v395, %v785
        %v787 = vpop.f32.mrb[0].mxu0
        %v788 = vadd.f32 %v395, %v787
        %v789 = vpop.f32.mrb[0].mxu0
        %v790 = vadd.f32 %v400, %v789
        %v791 = vpop.f32.mrb[0].mxu0
        %v792 = vadd.f32 %v400, %v791
        %793 = vmatprep.mubr.bf16.mxu0 0
        %794 = vmatmul.mubr.bf16.gmra.mrb[0].mxu0 %v417
        %v795 = vpop.f32.mrb[0].mxu0
        %v796 = vadd.f32 %v405, %v795
        %v797 = vpop.f32.mrb[0].mxu0
        %v798 = vadd.f32 %v405, %v797
        %v799 = vpop.f32.mrb[0].mxu0
        %v800 = vadd.f32 %v410, %v799
        %v801 = vpop.f32.mrb[0].mxu0
        %v802 = vadd.f32 %v410, %v801
        %803 = vdwg.mxu0
        %vm804 = vcmp.gt.f32.partialorder %v786, 0.0
        %vm805 = vcmp.gt.f32.partialorder %v788, 0.0
        %vm806 = vcmp.gt.f32.partialorder %v790, 0.0
        %vm807 = vcmp.gt.f32.partialorder %v792, 0.0
        %vm808 = vcmp.gt.f32.partialorder %v796, 0.0
        %vm809 = vcmp.gt.f32.partialorder %v798, 0.0
        %vm810 = vcmp.gt.f32.partialorder %v800, 0.0
        %vm811 = vcmp.gt.f32.partialorder %v802, 0.0
        %v812 = vmul.f32 %v786, 0.01
        %v813 = vmul.f32 %v788, 0.01
        %v814 = vmul.f32 %v790, 0.01
        %v815 = vmul.f32 %v792, 0.01
        %v816 = vmul.f32 %v796, 0.01
        %v817 = vmul.f32 %v798, 0.01
        %v818 = vmul.f32 %v800, 0.01
        %v819 = vmul.f32 %v802, 0.01
        %v820 = vsel %vm804, %v786, %v812
        %v821 = vsel %vm805, %v788, %v813
        %v822 = vsel %vm806, %v790, %v814
        %v823 = vsel %vm807, %v792, %v815
        %v824 = vsel %vm808, %v796, %v816
        %v825 = vsel %vm809, %v798, %v817
        %v826 = vsel %vm810, %v800, %v818
        %v827 = vsel %vm811, %v802, %v819
        %v828 = vpack.c.bf16 %v822, %v820
        %v829 = vpack.c.bf16 %v823, %v821
        %v830 = vpack.c.bf16 %v826, %v824
        %v831 = vpack.c.bf16 %v827, %v825
        %832 = vmatprep.subr.bf16.mxu0 %v829
        %833 = vmatpush1.bf16.msra.mxu0 %v828
        %834 = vmatprep.subr.bf16.mxu0 %v831
        %835 = vmatpush1.bf16.msra.mxu0 %v830
        %836 = vmatprep.subr.bf16.mxu0 0
        %837 = vmatpush1.bf16.msra.mxu0 0
        %838 = vmatprep.subr.bf16.mxu0 0
        %839 = vmatpush1.bf16.msra.mxu0 0
        %840 = vmatprep.subr.bf16.mxu0 0
        %841 = vmatpush1.bf16.msra.mxu0 0
        %842 = vmatprep.subr.bf16.mxu0 0
        %843 = vmatpush1.bf16.msra.mxu0 0
        %844 = vmatprep.subr.bf16.mxu0 0
        %845 = vmatpush1.bf16.msra.mxu0 0
        %846 = vmatprep.subr.bf16.mxu0 0
        %847 = vmatpush1.bf16.msra.mxu0 0
        %848 = vmatprep.subr.bf16.mxu0 0
        %849 = vmatpush1.bf16.msra.mxu0 0
        %850 = vmatprep.subr.bf16.mxu0 0
        %851 = vmatpush1.bf16.msra.mxu0 0
        %852 = vmatprep.subr.bf16.mxu0 0
        %853 = vmatpush1.bf16.msra.mxu0 0
        %854 = vmatprep.subr.bf16.mxu0 0
        %855 = vmatpush1.bf16.msra.mxu0 0
        %856 = vmatprep.subr.bf16.mxu0 0
        %857 = vmatpush1.bf16.msra.mxu0 0
        %858 = vmatprep.subr.bf16.mxu0 0
        %859 = vmatpush1.bf16.msra.mxu0 0
        %860 = vmatprep.subr.bf16.mxu0 0
        %861 = vmatpush1.bf16.msra.mxu0 0
        %862 = vmatprep.subr.bf16.mxu0 0
        %863 = vmatpush1.bf16.msra.mxu0 0
        %864 = vmatprep.mubr.bf16.mxu0 0
        %865 = vmatmul.mubr.bf16.gmra.mrb[0].mxu0 %v516
        %v866 = vpop.f32.mrb[0].mxu0
        %v867 = vadd.f32 %v503, %v866
        %v868 = vpop.f32.mrb[0].mxu0
        %v869 = vadd.f32 %v503, %v868
        %v870 = vpop.f32.mrb[0].mxu0
        %v871 = vadd.f32 %v508, %v870
        %v872 = vpop.f32.mrb[0].mxu0
        %v873 = vadd.f32 %v508, %v872
        %874 = vmatprep.mubr.bf16.mxu0 0
        %875 = vmatmul.mubr.bf16.gmra.mrb[0].mxu0 %v519
        %v876 = vpop.f32.mrb[0].mxu0
        %v877 = vadd.f32 %v513, %v876
        %v878 = vpop.f32.mrb[0].mxu0
        %v879 = vadd.f32 %v513, %v878
        %v880 = vpop.f32.mrb[0].mxu0
        %v881 = vpop.f32.mrb[0].mxu0
        %882 = vdwg.mxu0
        %s883 = scalar_lea.vmem %s133, 16 [#allocation2]
        %884 = vst [vmem:[%s883] sm:$0xff] %v867
        %885 = vst [vmem:[%s883 + $0x8] sm:$0xff] %v869
        %886 = vst [vmem:[%s883 + $0x40] sm:$0xff] %v871
        %887 = vst [vmem:[%s883 + $0x48] sm:$0xff] %v873
        %888 = vst [vmem:[%s883 + $0x80] sm:$0xff] %v877
        %889 = vst [vmem:[%s883 + $0x88] sm:$0xff] %v879
        %s890 = scalar_lea.vmem %s138, 32
        %v891 = vld [vmem:[%s890] sm:$0xff]
        %v892 = vld [vmem:[%s890 + $0x8] sm:$0xff]
        %v893 = vpack.c.bf16 %v891, %v891
        %v894 = vpack.c.bf16 %v892, %v892
        %v896 = vsel %vm196, %v893, 0
        %v899 = vsel %vm196, %v894, 0
        %901 = vmatprep.subr.bf16.mxu0 %v899
        %902 = vmatpush1.bf16.msra.mxu0 %v896
        %903 = vmatprep.subr.bf16.mxu0 0
        %904 = vmatpush1.bf16.msra.mxu0 0
        %905 = vmatprep.subr.bf16.mxu0 0
        %906 = vmatpush1.bf16.msra.mxu0 0
        %907 = vmatprep.subr.bf16.mxu0 0
        %908 = vmatpush1.bf16.msra.mxu0 0
        %909 = vmatprep.subr.bf16.mxu0 0
        %910 = vmatpush1.bf16.msra.mxu0 0
        %911 = vmatprep.subr.bf16.mxu0 0
        %912 = vmatpush1.bf16.msra.mxu0 0
        %913 = vmatprep.subr.bf16.mxu0 0
        %914 = vmatpush1.bf16.msra.mxu0 0
        %915 = vmatprep.subr.bf16.mxu0 0
        %916 = vmatpush1.bf16.msra.mxu0 0
        %917 = vmatprep.subr.bf16.mxu0 0
        %918 = vmatpush1.bf16.msra.mxu0 0
        %919 = vmatprep.subr.bf16.mxu0 0
        %920 = vmatpush1.bf16.msra.mxu0 0
        %921 = vmatprep.subr.bf16.mxu0 0
        %922 = vmatpush1.bf16.msra.mxu0 0
        %923 = vmatprep.subr.bf16.mxu0 0
        %924 = vmatpush1.bf16.msra.mxu0 0
        %925 = vmatprep.subr.bf16.mxu0 0
        %926 = vmatpush1.bf16.msra.mxu0 0
        %927 = vmatprep.subr.bf16.mxu0 0
        %928 = vmatpush1.bf16.msra.mxu0 0
        %929 = vmatprep.subr.bf16.mxu0 0
        %930 = vmatpush1.bf16.msra.mxu0 0
        %931 = vmatprep.subr.bf16.mxu0 0
        %932 = vmatpush1.bf16.msra.mxu0 0
        %933 = vmatprep.mubr.bf16.mxu0 0
        %934 = vmatmul.mubr.bf16.gmra.mrb[0].mxu0 %v191
        %v935 = vpop.f32.mrb[0].mxu0
        %v936 = vadd.f32 %v172, %v935
        %v937 = vpop.f32.mrb[0].mxu0
        %v938 = vadd.f32 %v172, %v937
        %v939 = vpop.f32.mrb[0].mxu0
        %v940 = vadd.f32 %v177, %v939
        %v941 = vpop.f32.mrb[0].mxu0
        %v942 = vadd.f32 %v177, %v941
        %943 = vmatprep.mubr.bf16.mxu0 0
        %944 = vmatmul.mubr.bf16.gmra.mrb[0].mxu0 %v194
        %v945 = vpop.f32.mrb[0].mxu0
        %v946 = vadd.f32 %v182, %v945
        %v947 = vpop.f32.mrb[0].mxu0
        %v948 = vadd.f32 %v182, %v947
        %v949 = vpop.f32.mrb[0].mxu0
        %v950 = vadd.f32 %v187, %v949
        %v951 = vpop.f32.mrb[0].mxu0
        %v952 = vadd.f32 %v187, %v951
        %953 = vdwg.mxu0
        %vm954 = vcmp.gt.f32.partialorder %v936, 0.0
        %vm955 = vcmp.gt.f32.partialorder %v938, 0.0
        %vm956 = vcmp.gt.f32.partialorder %v940, 0.0
        %vm957 = vcmp.gt.f32.partialorder %v942, 0.0
        %vm958 = vcmp.gt.f32.partialorder %v946, 0.0
        %vm959 = vcmp.gt.f32.partialorder %v948, 0.0
        %vm960 = vcmp.gt.f32.partialorder %v950, 0.0
        %vm961 = vcmp.gt.f32.partialorder %v952, 0.0
        %v962 = vmul.f32 %v936, 0.01
        %v963 = vmul.f32 %v938, 0.01
        %v964 = vmul.f32 %v940, 0.01
        %v965 = vmul.f32 %v942, 0.01
        %v966 = vmul.f32 %v946, 0.01
        %v967 = vmul.f32 %v948, 0.01
        %v968 = vmul.f32 %v950, 0.01
        %v969 = vmul.f32 %v952, 0.01
        %v970 = vsel %vm954, %v936, %v962
        %v971 = vsel %vm955, %v938, %v963
        %v972 = vsel %vm956, %v940, %v964
        %v973 = vsel %vm957, %v942, %v965
        %v974 = vsel %vm958, %v946, %v966
        %v975 = vsel %vm959, %v948, %v967
        %v976 = vsel %vm960, %v950, %v968
        %v977 = vsel %vm961, %v952, %v969
        %v978 = vpack.c.bf16 %v972, %v970
        %v979 = vpack.c.bf16 %v973, %v971
        %v980 = vpack.c.bf16 %v976, %v974
        %v981 = vpack.c.bf16 %v977, %v975
        %982 = vmatprep.subr.bf16.mxu0 %v979
        %983 = vmatpush1.bf16.msra.mxu0 %v978
        %984 = vmatprep.subr.bf16.mxu0 %v981
        %985 = vmatpush1.bf16.msra.mxu0 %v980
        %986 = vmatprep.subr.bf16.mxu0 0
        %987 = vmatpush1.bf16.msra.mxu0 0
        %988 = vmatprep.subr.bf16.mxu0 0
        %989 = vmatpush1.bf16.msra.mxu0 0
        %990 = vmatprep.subr.bf16.mxu0 0
        %991 = vmatpush1.bf16.msra.mxu0 0
        %992 = vmatprep.subr.bf16.mxu0 0
        %993 = vmatpush1.bf16.msra.mxu0 0
        %994 = vmatprep.subr.bf16.mxu0 0
        %995 = vmatpush1.bf16.msra.mxu0 0
        %996 = vmatprep.subr.bf16.mxu0 0
        %997 = vmatpush1.bf16.msra.mxu0 0
        %998 = vmatprep.subr.bf16.mxu0 0
        %999 = vmatpush1.bf16.msra.mxu0 0
        %1000 = vmatprep.subr.bf16.mxu0 0
        %1001 = vmatpush1.bf16.msra.mxu0 0
        %1002 = vmatprep.subr.bf16.mxu0 0
        %1003 = vmatpush1.bf16.msra.mxu0 0
        %1004 = vmatprep.subr.bf16.mxu0 0
        %1005 = vmatpush1.bf16.msra.mxu0 0
        %1006 = vmatprep.subr.bf16.mxu0 0
        %1007 = vmatpush1.bf16.msra.mxu0 0
        %1008 = vmatprep.subr.bf16.mxu0 0
        %1009 = vmatpush1.bf16.msra.mxu0 0
        %1010 = vmatprep.subr.bf16.mxu0 0
        %1011 = vmatpush1.bf16.msra.mxu0 0
        %1012 = vmatprep.subr.bf16.mxu0 0
        %1013 = vmatpush1.bf16.msra.mxu0 0
        %1014 = vmatprep.mubr.bf16.mxu0 0
        %1015 = vmatmul.mubr.bf16.gmra.mrb[0].mxu0 %v306
        %v1016 = vpop.f32.mrb[0].mxu0
        %v1017 = vadd.f32 %v287, %v1016
        %v1018 = vpop.f32.mrb[0].mxu0
        %v1019 = vadd.f32 %v287, %v1018
        %v1020 = vpop.f32.mrb[0].mxu0
        %v1021 = vadd.f32 %v292, %v1020
        %v1022 = vpop.f32.mrb[0].mxu0
        %v1023 = vadd.f32 %v292, %v1022
        %1024 = vmatprep.mubr.bf16.mxu0 0
        %1025 = vmatmul.mubr.bf16.gmra.mrb[0].mxu0 %v309
        %v1026 = vpop.f32.mrb[0].mxu0
        %v1027 = vadd.f32 %v297, %v1026
        %v1028 = vpop.f32.mrb[0].mxu0
        %v1029 = vadd.f32 %v297, %v1028
        %v1030 = vpop.f32.mrb[0].mxu0
        %v1031 = vadd.f32 %v302, %v1030
        %v1032 = vpop.f32.mrb[0].mxu0
        %v1033 = vadd.f32 %v302, %v1032
        %1034 = vdwg.mxu0
        %vm1035 = vcmp.gt.f32.partialorder %v1017, 0.0
        %vm1036 = vcmp.gt.f32.partialorder %v1019, 0.0
        %vm1037 = vcmp.gt.f32.partialorder %v1021, 0.0
        %vm1038 = vcmp.gt.f32.partialorder %v1023, 0.0
        %vm1039 = vcmp.gt.f32.partialorder %v1027, 0.0
        %vm1040 = vcmp.gt.f32.partialorder %v1029, 0.0
        %vm1041 = vcmp.gt.f32.partialorder %v1031, 0.0
        %vm1042 = vcmp.gt.f32.partialorder %v1033, 0.0
        %v1043 = vmul.f32 %v1017, 0.01
        %v1044 = vmul.f32 %v1019, 0.01
        %v1045 = vmul.f32 %v1021, 0.01
        %v1046 = vmul.f32 %v1023, 0.01
        %v1047 = vmul.f32 %v1027, 0.01
        %v1048 = vmul.f32 %v1029, 0.01
        %v1049 = vmul.f32 %v1031, 0.01
        %v1050 = vmul.f32 %v1033, 0.01
        %v1051 = vsel %vm1035, %v1017, %v1043
        %v1052 = vsel %vm1036, %v1019, %v1044
        %v1053 = vsel %vm1037, %v1021, %v1045
        %v1054 = vsel %vm1038, %v1023, %v1046
        %v1055 = vsel %vm1039, %v1027, %v1047
        %v1056 = vsel %vm1040, %v1029, %v1048
        %v1057 = vsel %vm1041, %v1031, %v1049
        %v1058 = vsel %vm1042, %v1033, %v1050
        %v1059 = vpack.c.bf16 %v1053, %v1051
        %v1060 = vpack.c.bf16 %v1054, %v1052
        %v1061 = vpack.c.bf16 %v1057, %v1055
        %v1062 = vpack.c.bf16 %v1058, %v1056
        %1063 = vmatprep.subr.bf16.mxu0 %v1060
        %1064 = vmatpush1.bf16.msra.mxu0 %v1059
        %1065 = vmatprep.subr.bf16.mxu0 %v1062
        %1066 = vmatpush1.bf16.msra.mxu0 %v1061
        %1067 = vmatprep.subr.bf16.mxu0 %v899
        %1068 = vmatpush1.bf16.msra.mxu0 %v896
        %1069 = vmatprep.subr.bf16.mxu0 0
        %1070 = vmatpush1.bf16.msra.mxu0 0
        %1071 = vmatprep.subr.bf16.mxu0 0
        %1072 = vmatpush1.bf16.msra.mxu0 0
        %1073 = vmatprep.subr.bf16.mxu0 0
        %1074 = vmatpush1.bf16.msra.mxu0 0
        %1075 = vmatprep.subr.bf16.mxu0 0
        %1076 = vmatpush1.bf16.msra.mxu0 0
        %1077 = vmatprep.subr.bf16.mxu0 0
        %1078 = vmatpush1.bf16.msra.mxu0 0
        %1079 = vmatprep.subr.bf16.mxu0 0
        %1080 = vmatpush1.bf16.msra.mxu0 0
        %1081 = vmatprep.subr.bf16.mxu0 0
        %1082 = vmatpush1.bf16.msra.mxu0 0
        %1083 = vmatprep.subr.bf16.mxu0 0
        %1084 = vmatpush1.bf16.msra.mxu0 0
        %1085 = vmatprep.subr.bf16.mxu0 0
        %1086 = vmatpush1.bf16.msra.mxu0 0
        %1087 = vmatprep.subr.bf16.mxu0 0
        %1088 = vmatpush1.bf16.msra.mxu0 0
        %1089 = vmatprep.subr.bf16.mxu0 0
        %1090 = vmatpush1.bf16.msra.mxu0 0
        %1091 = vmatprep.subr.bf16.mxu0 0
        %1092 = vmatpush1.bf16.msra.mxu0 0
        %1093 = vmatprep.subr.bf16.mxu0 0
        %1094 = vmatpush1.bf16.msra.mxu0 0
        %1095 = vmatprep.mubr.bf16.mxu0 0
        %1096 = vmatmul.mubr.bf16.gmra.mrb[0].mxu0 %v414
        %v1097 = vpop.f32.mrb[0].mxu0
        %v1098 = vadd.f32 %v395, %v1097
        %v1099 = vpop.f32.mrb[0].mxu0
        %v1100 = vadd.f32 %v395, %v1099
        %v1101 = vpop.f32.mrb[0].mxu0
        %v1102 = vadd.f32 %v400, %v1101
        %v1103 = vpop.f32.mrb[0].mxu0
        %v1104 = vadd.f32 %v400, %v1103
        %1105 = vmatprep.mubr.bf16.mxu0 0
        %1106 = vmatmul.mubr.bf16.gmra.mrb[0].mxu0 %v417
        %v1107 = vpop.f32.mrb[0].mxu0
        %v1108 = vadd.f32 %v405, %v1107
        %v1109 = vpop.f32.mrb[0].mxu0
        %v1110 = vadd.f32 %v405, %v1109
        %v1111 = vpop.f32.mrb[0].mxu0
        %v1112 = vadd.f32 %v410, %v1111
        %v1113 = vpop.f32.mrb[0].mxu0
        %v1114 = vadd.f32 %v410, %v1113
        %1115 = vdwg.mxu0
        %vm1116 = vcmp.gt.f32.partialorder %v1098, 0.0
        %vm1117 = vcmp.gt.f32.partialorder %v1100, 0.0
        %vm1118 = vcmp.gt.f32.partialorder %v1102, 0.0
        %vm1119 = vcmp.gt.f32.partialorder %v1104, 0.0
        %vm1120 = vcmp.gt.f32.partialorder %v1108, 0.0
        %vm1121 = vcmp.gt.f32.partialorder %v1110, 0.0
        %vm1122 = vcmp.gt.f32.partialorder %v1112, 0.0
        %vm1123 = vcmp.gt.f32.partialorder %v1114, 0.0
        %v1124 = vmul.f32 %v1098, 0.01
        %v1125 = vmul.f32 %v1100, 0.01
        %v1126 = vmul.f32 %v1102, 0.01
        %v1127 = vmul.f32 %v1104, 0.01
        %v1128 = vmul.f32 %v1108, 0.01
        %v1129 = vmul.f32 %v1110, 0.01
        %v1130 = vmul.f32 %v1112, 0.01
        %v1131 = vmul.f32 %v1114, 0.01
        %v1132 = vsel %vm1116, %v1098, %v1124
        %v1133 = vsel %vm1117, %v1100, %v1125
        %v1134 = vsel %vm1118, %v1102, %v1126
        %v1135 = vsel %vm1119, %v1104, %v1127
        %v1136 = vsel %vm1120, %v1108, %v1128
        %v1137 = vsel %vm1121, %v1110, %v1129
        %v1138 = vsel %vm1122, %v1112, %v1130
        %v1139 = vsel %vm1123, %v1114, %v1131
        %v1140 = vpack.c.bf16 %v1134, %v1132
        %v1141 = vpack.c.bf16 %v1135, %v1133
        %v1142 = vpack.c.bf16 %v1138, %v1136
        %v1143 = vpack.c.bf16 %v1139, %v1137
        %1144 = vmatprep.subr.bf16.mxu0 %v1141
        %1145 = vmatpush1.bf16.msra.mxu0 %v1140
        %1146 = vmatprep.subr.bf16.mxu0 %v1143
        %1147 = vmatpush1.bf16.msra.mxu0 %v1142
        %1148 = vmatprep.subr.bf16.mxu0 0
        %1149 = vmatpush1.bf16.msra.mxu0 0
        %1150 = vmatprep.subr.bf16.mxu0 0
        %1151 = vmatpush1.bf16.msra.mxu0 0
        %1152 = vmatprep.subr.bf16.mxu0 0
        %1153 = vmatpush1.bf16.msra.mxu0 0
        %1154 = vmatprep.subr.bf16.mxu0 0
        %1155 = vmatpush1.bf16.msra.mxu0 0
        %1156 = vmatprep.subr.bf16.mxu0 0
        %1157 = vmatpush1.bf16.msra.mxu0 0
        %1158 = vmatprep.subr.bf16.mxu0 0
        %1159 = vmatpush1.bf16.msra.mxu0 0
        %1160 = vmatprep.subr.bf16.mxu0 0
        %1161 = vmatpush1.bf16.msra.mxu0 0
        %1162 = vmatprep.subr.bf16.mxu0 0
        %1163 = vmatpush1.bf16.msra.mxu0 0
        %1164 = vmatprep.subr.bf16.mxu0 0
        %1165 = vmatpush1.bf16.msra.mxu0 0
        %1166 = vmatprep.subr.bf16.mxu0 0
        %1167 = vmatpush1.bf16.msra.mxu0 0
        %1168 = vmatprep.subr.bf16.mxu0 0
        %1169 = vmatpush1.bf16.msra.mxu0 0
        %1170 = vmatprep.subr.bf16.mxu0 0
        %1171 = vmatpush1.bf16.msra.mxu0 0
        %1172 = vmatprep.subr.bf16.mxu0 0
        %1173 = vmatpush1.bf16.msra.mxu0 0
        %1174 = vmatprep.subr.bf16.mxu0 0
        %1175 = vmatpush1.bf16.msra.mxu0 0
        %1176 = vmatprep.mubr.bf16.mxu0 0
        %1177 = vmatmul.mubr.bf16.gmra.mrb[0].mxu0 %v516
        %v1178 = vpop.f32.mrb[0].mxu0
        %v1179 = vadd.f32 %v503, %v1178
        %v1180 = vpop.f32.mrb[0].mxu0
        %v1181 = vadd.f32 %v503, %v1180
        %v1182 = vpop.f32.mrb[0].mxu0
        %v1183 = vadd.f32 %v508, %v1182
        %v1184 = vpop.f32.mrb[0].mxu0
        %v1185 = vadd.f32 %v508, %v1184
        %1186 = vmatprep.mubr.bf16.mxu0 0
        %1187 = vmatmul.mubr.bf16.gmra.mrb[0].mxu0 %v519
        %v1188 = vpop.f32.mrb[0].mxu0
        %v1189 = vadd.f32 %v513, %v1188
        %v1190 = vpop.f32.mrb[0].mxu0
        %v1191 = vadd.f32 %v513, %v1190
        %v1192 = vpop.f32.mrb[0].mxu0
        %v1193 = vpop.f32.mrb[0].mxu0
        %1194 = vdwg.mxu0
        %s1195 = scalar_lea.vmem %s133, 32 [#allocation2]
        %1196 = vst [vmem:[%s1195] sm:$0xff] %v1179
        %1197 = vst [vmem:[%s1195 + $0x8] sm:$0xff] %v1181
        %1198 = vst [vmem:[%s1195 + $0x40] sm:$0xff] %v1183
        %1199 = vst [vmem:[%s1195 + $0x48] sm:$0xff] %v1185
        %1200 = vst [vmem:[%s1195 + $0x80] sm:$0xff] %v1189
        %1201 = vst [vmem:[%s1195 + $0x88] sm:$0xff] %v1191
        %s1202 = scalar_lea.vmem %s138, 48
        %v1203 = vld [vmem:[%s1202] sm:$0xff]
        %v1204 = vld [vmem:[%s1202 + $0x8] sm:$0xff]
        %v1205 = vpack.c.bf16 %v1203, %v1203
        %v1206 = vpack.c.bf16 %v1204, %v1204
        %v1208 = vsel %vm196, %v1205, 0
        %v1211 = vsel %vm196, %v1206, 0
        %1213 = vmatprep.subr.bf16.mxu0 %v1211
        %1214 = vmatpush1.bf16.msra.mxu0 %v1208
        %1215 = vmatprep.subr.bf16.mxu0 0
        %1216 = vmatpush1.bf16.msra.mxu0 0
        %1217 = vmatprep.subr.bf16.mxu0 0
        %1218 = vmatpush1.bf16.msra.mxu0 0
        %1219 = vmatprep.subr.bf16.mxu0 0
        %1220 = vmatpush1.bf16.msra.mxu0 0
        %1221 = vmatprep.subr.bf16.mxu0 0
        %1222 = vmatpush1.bf16.msra.mxu0 0
        %1223 = vmatprep.subr.bf16.mxu0 0
        %1224 = vmatpush1.bf16.msra.mxu0 0
        %1225 = vmatprep.subr.bf16.mxu0 0
        %1226 = vmatpush1.bf16.msra.mxu0 0
        %1227 = vmatprep.subr.bf16.mxu0 0
        %1228 = vmatpush1.bf16.msra.mxu0 0
        %1229 = vmatprep.subr.bf16.mxu0 0
        %1230 = vmatpush1.bf16.msra.mxu0 0
        %1231 = vmatprep.subr.bf16.mxu0 0
        %1232 = vmatpush1.bf16.msra.mxu0 0
        %1233 = vmatprep.subr.bf16.mxu0 0
        %1234 = vmatpush1.bf16.msra.mxu0 0
        %1235 = vmatprep.subr.bf16.mxu0 0
        %1236 = vmatpush1.bf16.msra.mxu0 0
        %1237 = vmatprep.subr.bf16.mxu0 0
        %1238 = vmatpush1.bf16.msra.mxu0 0
        %1239 = vmatprep.subr.bf16.mxu0 0
        %1240 = vmatpush1.bf16.msra.mxu0 0
        %1241 = vmatprep.subr.bf16.mxu0 0
        %1242 = vmatpush1.bf16.msra.mxu0 0
        %1243 = vmatprep.subr.bf16.mxu0 0
        %1244 = vmatpush1.bf16.msra.mxu0 0
        %1245 = vmatprep.mubr.bf16.mxu0 0
        %1246 = vmatmul.mubr.bf16.gmra.mrb[0].mxu0 %v191
        %v1247 = vpop.f32.mrb[0].mxu0
        %v1248 = vadd.f32 %v172, %v1247
        %v1249 = vpop.f32.mrb[0].mxu0
        %v1250 = vadd.f32 %v172, %v1249
        %v1251 = vpop.f32.mrb[0].mxu0
        %v1252 = vadd.f32 %v177, %v1251
        %v1253 = vpop.f32.mrb[0].mxu0
        %v1254 = vadd.f32 %v177, %v1253
        %1255 = vmatprep.mubr.bf16.mxu0 0
        %1256 = vmatmul.mubr.bf16.gmra.mrb[0].mxu0 %v194
        %v1257 = vpop.f32.mrb[0].mxu0
        %v1258 = vadd.f32 %v182, %v1257
        %v1259 = vpop.f32.mrb[0].mxu0
        %v1260 = vadd.f32 %v182, %v1259
        %v1261 = vpop.f32.mrb[0].mxu0
        %v1262 = vadd.f32 %v187, %v1261
        %v1263 = vpop.f32.mrb[0].mxu0
        %v1264 = vadd.f32 %v187, %v1263
        %1265 = vdwg.mxu0
        %vm1266 = vcmp.gt.f32.partialorder %v1248, 0.0
        %vm1267 = vcmp.gt.f32.partialorder %v1250, 0.0
        %vm1268 = vcmp.gt.f32.partialorder %v1252, 0.0
        %vm1269 = vcmp.gt.f32.partialorder %v1254, 0.0
        %vm1270 = vcmp.gt.f32.partialorder %v1258, 0.0
        %vm1271 = vcmp.gt.f32.partialorder %v1260, 0.0
        %vm1272 = vcmp.gt.f32.partialorder %v1262, 0.0
        %vm1273 = vcmp.gt.f32.partialorder %v1264, 0.0
        %v1274 = vmul.f32 %v1248, 0.01
        %v1275 = vmul.f32 %v1250, 0.01
        %v1276 = vmul.f32 %v1252, 0.01
        %v1277 = vmul.f32 %v1254, 0.01
        %v1278 = vmul.f32 %v1258, 0.01
        %v1279 = vmul.f32 %v1260, 0.01
        %v1280 = vmul.f32 %v1262, 0.01
        %v1281 = vmul.f32 %v1264, 0.01
        %v1282 = vsel %vm1266, %v1248, %v1274
        %v1283 = vsel %vm1267, %v1250, %v1275
        %v1284 = vsel %vm1268, %v1252, %v1276
        %v1285 = vsel %vm1269, %v1254, %v1277
        %v1286 = vsel %vm1270, %v1258, %v1278
        %v1287 = vsel %vm1271, %v1260, %v1279
        %v1288 = vsel %vm1272, %v1262, %v1280
        %v1289 = vsel %vm1273, %v1264, %v1281
        %v1290 = vpack.c.bf16 %v1284, %v1282
        %v1291 = vpack.c.bf16 %v1285, %v1283
        %v1292 = vpack.c.bf16 %v1288, %v1286
        %v1293 = vpack.c.bf16 %v1289, %v1287
        %1294 = vmatprep.subr.bf16.mxu0 %v1291
        %1295 = vmatpush1.bf16.msra.mxu0 %v1290
        %1296 = vmatprep.subr.bf16.mxu0 %v1293
        %1297 = vmatpush1.bf16.msra.mxu0 %v1292
        %1298 = vmatprep.subr.bf16.mxu0 0
        %1299 = vmatpush1.bf16.msra.mxu0 0
        %1300 = vmatprep.subr.bf16.mxu0 0
        %1301 = vmatpush1.bf16.msra.mxu0 0
        %1302 = vmatprep.subr.bf16.mxu0 0
        %1303 = vmatpush1.bf16.msra.mxu0 0
        %1304 = vmatprep.subr.bf16.mxu0 0
        %1305 = vmatpush1.bf16.msra.mxu0 0
        %1306 = vmatprep.subr.bf16.mxu0 0
        %1307 = vmatpush1.bf16.msra.mxu0 0
        %1308 = vmatprep.subr.bf16.mxu0 0
        %1309 = vmatpush1.bf16.msra.mxu0 0
        %1310 = vmatprep.subr.bf16.mxu0 0
        %1311 = vmatpush1.bf16.msra.mxu0 0
        %1312 = vmatprep.subr.bf16.mxu0 0
        %1313 = vmatpush1.bf16.msra.mxu0 0
        %1314 = vmatprep.subr.bf16.mxu0 0
        %1315 = vmatpush1.bf16.msra.mxu0 0
        %1316 = vmatprep.subr.bf16.mxu0 0
        %1317 = vmatpush1.bf16.msra.mxu0 0
        %1318 = vmatprep.subr.bf16.mxu0 0
        %1319 = vmatpush1.bf16.msra.mxu0 0
        %1320 = vmatprep.subr.bf16.mxu0 0
        %1321 = vmatpush1.bf16.msra.mxu0 0
        %1322 = vmatprep.subr.bf16.mxu0 0
        %1323 = vmatpush1.bf16.msra.mxu0 0
        %1324 = vmatprep.subr.bf16.mxu0 0
        %1325 = vmatpush1.bf16.msra.mxu0 0
        %1326 = vmatprep.mubr.bf16.mxu0 0
        %1327 = vmatmul.mubr.bf16.gmra.mrb[0].mxu0 %v306
        %v1328 = vpop.f32.mrb[0].mxu0
        %v1329 = vadd.f32 %v287, %v1328
        %v1330 = vpop.f32.mrb[0].mxu0
        %v1331 = vadd.f32 %v287, %v1330
        %v1332 = vpop.f32.mrb[0].mxu0
        %v1333 = vadd.f32 %v292, %v1332
        %v1334 = vpop.f32.mrb[0].mxu0
        %v1335 = vadd.f32 %v292, %v1334
        %1336 = vmatprep.mubr.bf16.mxu0 0
        %1337 = vmatmul.mubr.bf16.gmra.mrb[0].mxu0 %v309
        %v1338 = vpop.f32.mrb[0].mxu0
        %v1339 = vadd.f32 %v297, %v1338
        %v1340 = vpop.f32.mrb[0].mxu0
        %v1341 = vadd.f32 %v297, %v1340
        %v1342 = vpop.f32.mrb[0].mxu0
        %v1343 = vadd.f32 %v302, %v1342
        %v1344 = vpop.f32.mrb[0].mxu0
        %v1345 = vadd.f32 %v302, %v1344
        %1346 = vdwg.mxu0
        %vm1347 = vcmp.gt.f32.partialorder %v1329, 0.0
        %vm1348 = vcmp.gt.f32.partialorder %v1331, 0.0
        %vm1349 = vcmp.gt.f32.partialorder %v1333, 0.0
        %vm1350 = vcmp.gt.f32.partialorder %v1335, 0.0
        %vm1351 = vcmp.gt.f32.partialorder %v1339, 0.0
        %vm1352 = vcmp.gt.f32.partialorder %v1341, 0.0
        %vm1353 = vcmp.gt.f32.partialorder %v1343, 0.0
        %vm1354 = vcmp.gt.f32.partialorder %v1345, 0.0
        %v1355 = vmul.f32 %v1329, 0.01
        %v1356 = vmul.f32 %v1331, 0.01
        %v1357 = vmul.f32 %v1333, 0.01
        %v1358 = vmul.f32 %v1335, 0.01
        %v1359 = vmul.f32 %v1339, 0.01
        %v1360 = vmul.f32 %v1341, 0.01
        %v1361 = vmul.f32 %v1343, 0.01
        %v1362 = vmul.f32 %v1345, 0.01
        %v1363 = vsel %vm1347, %v1329, %v1355
        %v1364 = vsel %vm1348, %v1331, %v1356
        %v1365 = vsel %vm1349, %v1333, %v1357
        %v1366 = vsel %vm1350, %v1335, %v1358
        %v1367 = vsel %vm1351, %v1339, %v1359
        %v1368 = vsel %vm1352, %v1341, %v1360
        %v1369 = vsel %vm1353, %v1343, %v1361
        %v1370 = vsel %vm1354, %v1345, %v1362
        %v1371 = vpack.c.bf16 %v1365, %v1363
        %v1372 = vpack.c.bf16 %v1366, %v1364
        %v1373 = vpack.c.bf16 %v1369, %v1367
        %v1374 = vpack.c.bf16 %v1370, %v1368
        %1375 = vmatprep.subr.bf16.mxu0 %v1372
        %1376 = vmatpush1.bf16.msra.mxu0 %v1371
        %1377 = vmatprep.subr.bf16.mxu0 %v1374
        %1378 = vmatpush1.bf16.msra.mxu0 %v1373
        %1379 = vmatprep.subr.bf16.mxu0 %v1211
        %1380 = vmatpush1.bf16.msra.mxu0 %v1208
        %1381 = vmatprep.subr.bf16.mxu0 0
        %1382 = vmatpush1.bf16.msra.mxu0 0
        %1383 = vmatprep.subr.bf16.mxu0 0
        %1384 = vmatpush1.bf16.msra.mxu0 0
        %1385 = vmatprep.subr.bf16.mxu0 0
        %1386 = vmatpush1.bf16.msra.mxu0 0
        %1387 = vmatprep.subr.bf16.mxu0 0
        %1388 = vmatpush1.bf16.msra.mxu0 0
        %1389 = vmatprep.subr.bf16.mxu0 0
        %1390 = vmatpush1.bf16.msra.mxu0 0
        %1391 = vmatprep.subr.bf16.mxu0 0
        %1392 = vmatpush1.bf16.msra.mxu0 0
        %1393 = vmatprep.subr.bf16.mxu0 0
        %1394 = vmatpush1.bf16.msra.mxu0 0
        %1395 = vmatprep.subr.bf16.mxu0 0
        %1396 = vmatpush1.bf16.msra.mxu0 0
        %1397 = vmatprep.subr.bf16.mxu0 0
        %1398 = vmatpush1.bf16.msra.mxu0 0
        %1399 = vmatprep.subr.bf16.mxu0 0
        %1400 = vmatpush1.bf16.msra.mxu0 0
        %1401 = vmatprep.subr.bf16.mxu0 0
        %1402 = vmatpush1.bf16.msra.mxu0 0
        %1403 = vmatprep.subr.bf16.mxu0 0
        %1404 = vmatpush1.bf16.msra.mxu0 0
        %1405 = vmatprep.subr.bf16.mxu0 0
        %1406 = vmatpush1.bf16.msra.mxu0 0
        %1407 = vmatprep.mubr.bf16.mxu0 0
        %1408 = vmatmul.mubr.bf16.gmra.mrb[0].mxu0 %v414
        %v1409 = vpop.f32.mrb[0].mxu0
        %v1410 = vadd.f32 %v395, %v1409
        %v1411 = vpop.f32.mrb[0].mxu0
        %v1412 = vadd.f32 %v395, %v1411
        %v1413 = vpop.f32.mrb[0].mxu0
        %v1414 = vadd.f32 %v400, %v1413
        %v1415 = vpop.f32.mrb[0].mxu0
        %v1416 = vadd.f32 %v400, %v1415
        %1417 = vmatprep.mubr.bf16.mxu0 0
        %1418 = vmatmul.mubr.bf16.gmra.mrb[0].mxu0 %v417
        %v1419 = vpop.f32.mrb[0].mxu0
        %v1420 = vadd.f32 %v405, %v1419
        %v1421 = vpop.f32.mrb[0].mxu0
        %v1422 = vadd.f32 %v405, %v1421
        %v1423 = vpop.f32.mrb[0].mxu0
        %v1424 = vadd.f32 %v410, %v1423
        %v1425 = vpop.f32.mrb[0].mxu0
        %v1426 = vadd.f32 %v410, %v1425
        %1427 = vdwg.mxu0
        %vm1428 = vcmp.gt.f32.partialorder %v1410, 0.0
        %vm1429 = vcmp.gt.f32.partialorder %v1412, 0.0
        %vm1430 = vcmp.gt.f32.partialorder %v1414, 0.0
        %vm1431 = vcmp.gt.f32.partialorder %v1416, 0.0
        %vm1432 = vcmp.gt.f32.partialorder %v1420, 0.0
        %vm1433 = vcmp.gt.f32.partialorder %v1422, 0.0
        %vm1434 = vcmp.gt.f32.partialorder %v1424, 0.0
        %vm1435 = vcmp.gt.f32.partialorder %v1426, 0.0
        %v1436 = vmul.f32 %v1410, 0.01
        %v1437 = vmul.f32 %v1412, 0.01
        %v1438 = vmul.f32 %v1414, 0.01
        %v1439 = vmul.f32 %v1416, 0.01
        %v1440 = vmul.f32 %v1420, 0.01
        %v1441 = vmul.f32 %v1422, 0.01
        %v1442 = vmul.f32 %v1424, 0.01
        %v1443 = vmul.f32 %v1426, 0.01
        %v1444 = vsel %vm1428, %v1410, %v1436
        %v1445 = vsel %vm1429, %v1412, %v1437
        %v1446 = vsel %vm1430, %v1414, %v1438
        %v1447 = vsel %vm1431, %v1416, %v1439
        %v1448 = vsel %vm1432, %v1420, %v1440
        %v1449 = vsel %vm1433, %v1422, %v1441
        %v1450 = vsel %vm1434, %v1424, %v1442
        %v1451 = vsel %vm1435, %v1426, %v1443
        %v1452 = vpack.c.bf16 %v1446, %v1444
        %v1453 = vpack.c.bf16 %v1447, %v1445
        %v1454 = vpack.c.bf16 %v1450, %v1448
        %v1455 = vpack.c.bf16 %v1451, %v1449
        %1456 = vmatprep.subr.bf16.mxu0 %v1453
        %1457 = vmatpush1.bf16.msra.mxu0 %v1452
        %1458 = vmatprep.subr.bf16.mxu0 %v1455
        %1459 = vmatpush1.bf16.msra.mxu0 %v1454
        %1460 = vmatprep.subr.bf16.mxu0 0
        %1461 = vmatpush1.bf16.msra.mxu0 0
        %1462 = vmatprep.subr.bf16.mxu0 0
        %1463 = vmatpush1.bf16.msra.mxu0 0
        %1464 = vmatprep.subr.bf16.mxu0 0
        %1465 = vmatpush1.bf16.msra.mxu0 0
        %1466 = vmatprep.subr.bf16.mxu0 0
        %1467 = vmatpush1.bf16.msra.mxu0 0
        %1468 = vmatprep.subr.bf16.mxu0 0
        %1469 = vmatpush1.bf16.msra.mxu0 0
        %1470 = vmatprep.subr.bf16.mxu0 0
        %1471 = vmatpush1.bf16.msra.mxu0 0
        %1472 = vmatprep.subr.bf16.mxu0 0
        %1473 = vmatpush1.bf16.msra.mxu0 0
        %1474 = vmatprep.subr.bf16.mxu0 0
        %1475 = vmatpush1.bf16.msra.mxu0 0
        %1476 = vmatprep.subr.bf16.mxu0 0
        %1477 = vmatpush1.bf16.msra.mxu0 0
        %1478 = vmatprep.subr.bf16.mxu0 0
        %1479 = vmatpush1.bf16.msra.mxu0 0
        %1480 = vmatprep.subr.bf16.mxu0 0
        %1481 = vmatpush1.bf16.msra.mxu0 0
        %1482 = vmatprep.subr.bf16.mxu0 0
        %1483 = vmatpush1.bf16.msra.mxu0 0
        %1484 = vmatprep.subr.bf16.mxu0 0
        %1485 = vmatpush1.bf16.msra.mxu0 0
        %1486 = vmatprep.subr.bf16.mxu0 0
        %1487 = vmatpush1.bf16.msra.mxu0 0
        %1488 = vmatprep.mubr.bf16.mxu0 0
        %1489 = vmatmul.mubr.bf16.gmra.mrb[0].mxu0 %v516
        %v1490 = vpop.f32.mrb[0].mxu0
        %v1491 = vadd.f32 %v503, %v1490
        %v1492 = vpop.f32.mrb[0].mxu0
        %v1493 = vadd.f32 %v503, %v1492
        %v1494 = vpop.f32.mrb[0].mxu0
        %v1495 = vadd.f32 %v508, %v1494
        %v1496 = vpop.f32.mrb[0].mxu0
        %v1497 = vadd.f32 %v508, %v1496
        %1498 = vmatprep.mubr.bf16.mxu0 0
        %1499 = vmatmul.mubr.bf16.gmra.mrb[0].mxu0 %v519
        %v1500 = vpop.f32.mrb[0].mxu0
        %v1501 = vadd.f32 %v513, %v1500
        %v1502 = vpop.f32.mrb[0].mxu0
        %v1503 = vadd.f32 %v513, %v1502
        %v1504 = vpop.f32.mrb[0].mxu0
        %v1505 = vpop.f32.mrb[0].mxu0
        %1506 = vdwg.mxu0
        %s1507 = scalar_lea.vmem %s133, 48 [#allocation2]
        %1508 = vst [vmem:[%s1507] sm:$0xff] %v1491
        %1509 = vst [vmem:[%s1507 + $0x8] sm:$0xff] %v1493
        %1510 = vst [vmem:[%s1507 + $0x40] sm:$0xff] %v1495
        %1511 = vst [vmem:[%s1507 + $0x48] sm:$0xff] %v1497
        %1512 = vst [vmem:[%s1507 + $0x80] sm:$0xff] %v1501
        %1513 = vst [vmem:[%s1507 + $0x88] sm:$0xff] %v1503
        %s1514 = sand.u32 %s68, 1
        %s1515 = sand.u32 %s68, 1
        %s1516 = smul.addr %s1515, 192
        %s1517 = scalar_lea.vmem [#allocation2], %s1516
        // Predicated region
        $region29: #{forward.1} parent=27 // pred_check
          %p1518 = pneg %p78
        $region30: #{forward.1} parent=27 // pred_check_branch
          %1520 = sbr.rel (%p1518) target = $region32
        $region31: #{forward.1} parent=27 // pred_region
          %s1521 = smul.u32 8, %s13
          %s1522 = smul.addr %s1521, 8
          %s1523 = scalar_lea.vmem %s2, %s1522
          // Predicated region
          $region33: #{forward.1} parent=31 // pred_check
            _
          $region34: #{forward.1} parent=31 // pred_check_branch
            %1525 = sbr.rel (0) target = $region36
          $region35: #{forward.1} parent=31 // pred_region
            // Predicated region
            $region37: #{forward.1} parent=35 // pred_check
              _
            $region38: #{forward.1} parent=35 // pred_check_branch
              %1527 = sbr.rel (0) target = $region40
            $region39: #{forward.1} parent=35 // pred_region
              loop: start=0, step=1, limit=1
              $region41: #{forward.1} parent=39 // loop_pre_header
                _
              $region42: #{forward.1} parent=39 // loop_header
                %s1529 = sphi 0, %s1533
                %p1530 = scmp.ge.s32.totalorder %s1529, 1
                %s1534 = sphi %s1517, %s1517
                %s1535 = sphi %s1523, %s1523
              $region43: #{forward.1} parent=39 // loop_header_branch
                %1532 = sbr.rel (%p1530) target = $region47
              $region44: #{forward.1} parent=39 // loop_body
                %v1536 = vld [vmem:[%s1534] sm:$0xff]
                %1537 = vst [vmem:[%s1535] sm:$0xff] %v1536
                %v1538 = vld [vmem:[%s1534 + $0x8] sm:$0xff]
                %1539 = vst [vmem:[%s1535 + $0x8] sm:$0xff] %v1538
                %v1540 = vld [vmem:[%s1534 + $0x10] sm:$0xff]
                %1541 = vst [vmem:[%s1535 + $0x10] sm:$0xff] %v1540
                %v1542 = vld [vmem:[%s1534 + $0x18] sm:$0xff]
                %1543 = vst [vmem:[%s1535 + $0x18] sm:$0xff] %v1542
                %v1544 = vld [vmem:[%s1534 + $0x20] sm:$0xff]
                %1545 = vst [vmem:[%s1535 + $0x20] sm:$0xff] %v1544
                %v1546 = vld [vmem:[%s1534 + $0x28] sm:$0xff]
                %1547 = vst [vmem:[%s1535 + $0x28] sm:$0xff] %v1546
                %v1548 = vld [vmem:[%s1534 + $0x30] sm:$0xff]
                %1549 = vst [vmem:[%s1535 + $0x30] sm:$0xff] %v1548
                %v1550 = vld [vmem:[%s1534 + $0x38] sm:$0xff]
                %1551 = vst [vmem:[%s1535 + $0x38] sm:$0xff] %v1550
                %v1552 = vld [vmem:[%s1534 + $0x40] sm:$0xff]
                %1553 = vst [vmem:[%s1535 + $0x80] sm:$0xff] %v1552
                %v1554 = vld [vmem:[%s1534 + $0x48] sm:$0xff]
                %1555 = vst [vmem:[%s1535 + $0x88] sm:$0xff] %v1554
                %v1556 = vld [vmem:[%s1534 + $0x50] sm:$0xff]
                %1557 = vst [vmem:[%s1535 + $0x90] sm:$0xff] %v1556
                %v1558 = vld [vmem:[%s1534 + $0x58] sm:$0xff]
                %1559 = vst [vmem:[%s1535 + $0x98] sm:$0xff] %v1558
                %v1560 = vld [vmem:[%s1534 + $0x60] sm:$0xff]
                %1561 = vst [vmem:[%s1535 + $0xa0] sm:$0xff] %v1560
                %v1562 = vld [vmem:[%s1534 + $0x68] sm:$0xff]
                %1563 = vst [vmem:[%s1535 + $0xa8] sm:$0xff] %v1562
                %v1564 = vld [vmem:[%s1534 + $0x70] sm:$0xff]
                %1565 = vst [vmem:[%s1535 + $0xb0] sm:$0xff] %v1564
                %v1566 = vld [vmem:[%s1534 + $0x78] sm:$0xff]
                %1567 = vst [vmem:[%s1535 + $0xb8] sm:$0xff] %v1566
                %v1568 = vld [vmem:[%s1534 + $0x80] sm:$0xff]
                %1569 = vst [vmem:[%s1535 + $0x100] sm:$0xff] %v1568
                %v1570 = vld [vmem:[%s1534 + $0x88] sm:$0xff]
                %1571 = vst [vmem:[%s1535 + $0x108] sm:$0xff] %v1570
                %v1572 = vld [vmem:[%s1534 + $0x90] sm:$0xff]
                %1573 = vst [vmem:[%s1535 + $0x110] sm:$0xff] %v1572
                %v1574 = vld [vmem:[%s1534 + $0x98] sm:$0xff]
                %1575 = vst [vmem:[%s1535 + $0x118] sm:$0xff] %v1574
                %v1576 = vld [vmem:[%s1534 + $0xa0] sm:$0xff]
                %1577 = vst [vmem:[%s1535 + $0x120] sm:$0xff] %v1576
                %v1578 = vld [vmem:[%s1534 + $0xa8] sm:$0xff]
                %1579 = vst [vmem:[%s1535 + $0x128] sm:$0xff] %v1578
                %v1580 = vld [vmem:[%s1534 + $0xb0] sm:$0xff]
                %1581 = vst [vmem:[%s1535 + $0x130] sm:$0xff] %v1580
                %v1582 = vld [vmem:[%s1534 + $0xb8] sm:$0xff]
                %1583 = vst [vmem:[%s1535 + $0x138] sm:$0xff] %v1582
              $region45: #{forward.1} parent=39 // loop_footer
                %s1533 = sadd.s32 1, %s1529
              $region46: #{forward.1} parent=39 // loop_footer_branch
                %1528 = sbr.rel target = $region42
              $region47: #{forward.1} parent=39 // loop_exit
                _
            $region40: #{forward.1} parent=35 // pred_fallthru
              _
            // Predicated region
            $region48: #{forward.1} parent=35 // pred_check
              _
            $region49: #{forward.1} parent=35 // pred_check_branch
              %1585 = sbr.rel target = $region51
            $region50: #{forward.1} parent=35 // pred_region
              _
            $region51: #{forward.1} parent=35 // pred_fallthru
              _
          $region36: #{forward.1} parent=31 // pred_fallthru
            _
          %1586 = vnop
        $region32: #{forward.1} parent=27 // pred_fallthru
          _
      $region28: #{forward.1} parent=5 // pred_fallthru
        _
      %p1587 = scmp.le.s32.totalorder 2, %s8
      // Predicated region
      $region52: #{forward.1} parent=5 // pred_check
        %p1588 = pneg %p1587
      $region53: #{forward.1} parent=5 // pred_check_branch
        %1590 = sbr.rel (%p1588) target = $region55
      $region54: #{forward.1} parent=5 // pred_region
        %s1591 = ssub.s32 %s8, 2
        // Predicated region
        $region56: #{forward.1} parent=54 // pred_check
          %p1592 = pneg %p84
        $region57: #{forward.1} parent=54 // pred_check_branch
          %1594 = sbr.rel (%p1592) target = $region59
        $region58: #{forward.1} parent=54 // pred_region
          %s1595 = sand.u32 %s69, 1
          %s1596 = sand.u32 %s69, 1
          %s1597 = smul.addr %s1596, 192
          %s1598 = scalar_lea.vmem [#allocation2], %s1597
        $region59: #{forward.1} parent=54 // pred_fallthru
          _
      $region55: #{forward.1} parent=5 // pred_fallthru
        _
    $region6: #{forward.1} parent=1 // loop_footer
      %s12 = sadd.s32 1, %s8
    $region7: #{forward.1} parent=1 // loop_footer_branch
      %7 = sbr.rel target = $region3
    $region8: #{forward.1} parent=1 // loop_exit
      _

</llo_original>
